<compile_context>
chip_gen: v5e
topology: v5e:2x2
jax: 0.10.0
libtpu: 0.0.40
codegen_flags: <defaults>
</compile_context>

<pallas_src>
import numpy as np

import jax
import jax.numpy as jnp
from jax import lax
from jax.experimental import pallas as pl
from jax.experimental.pallas import tpu as pltpu


def _round_up(x, m):
    return (x + m - 1) // m * m


# ----------------------------------------------------------------------------
# Fused Pallas kernel for the whole 3-block stack
# ----------------------------------------------------------------------------
def _make_stack_kernel(H, W, blocks, pad_l):
    """blocks: static tuple of (mid_p, has_skip) per bottleneck."""
    HW = H * W
    TAP_OFFS = [dy * W + dx for dy in (-1, 0, 1) for dx in (-1, 0, 1)]

    def kernel(x_ref, mask_ref, *refs):
        *w_refs, o_ref, pad_ref, slab_ref = refs

        # Zero the halo buffer once per grid step (borders stay zero; the
        # interior is overwritten by every 3x3 conv).
        pad_ref[...] = jnp.zeros_like(pad_ref)

        def conv1x1(a, w, b):
            # a: (Cin, HW)  w: (Cout, Cin)  b: (Cout, 1) -> (Cout, HW)
            return jnp.dot(w, a, preferred_element_type=jnp.float32) + b

        def conv3x3(h, w2, b2, mid_p):
            # h: (mid_p, HW). Write it into the flat halo buffer at an
            # aligned lane offset, then gather the 9 shifted taps into the
            # im2col slab (masked at image borders), then ONE contraction.
            pad_ref[0:mid_p, pad_l:pad_l + HW] = h
            for t, off in enumerate(TAP_OFFS):
                s = pad_l + off
                win = pad_ref[0:mid_p, s:s + HW]
                slab_ref[t * mid_p:(t + 1) * mid_p, :] = (
                    win * mask_ref[t:t + 1, :])
            slab = slab_ref[0:9 * mid_p, :]                 # (9*mid_p, HW)
            return jnp.dot(w2, slab, preferred_element_type=jnp.float32) + b2

        a = x_ref[0].astype(jnp.float32)                    # (Cin, HW)
        i = 0
        for mid_p, has_skip in blocks:
            w1 = w_refs[i][...]; b1 = w_refs[i + 1][...]
            w2 = w_refs[i + 2][...]; b2 = w_refs[i + 3][...]
            w3 = w_refs[i + 4][...]; b3 = w_refs[i + 5][...]
            i += 6
            if has_skip:
                skip = conv1x1(a, w_refs[i][...], w_refs[i + 1][...])
                i += 2
            else:
                skip = a
            h = jnp.maximum(conv1x1(a, w1, b1), 0.0)
            h = jnp.maximum(conv3x3(h, w2, b2, mid_p), 0.0)
            a = skip + conv1x1(h, w3, b3)      # alpha already folded in w3/b3

        o_ref[0] = a.astype(o_ref.dtype)

    return kernel


def stacked_bottleneck(x_nchw, params, rezero):
    """Forward pass of StackedBottleNeck. x_nchw: (N, C_in, H, W) NCHW."""
    N, C_in, H, W = x_nchw.shape
    HW = H * W
    C_out = params[-1]["w3"].shape[3]
    x = x_nchw.reshape(N, C_in, HW)            # channel-major, lane-dense HW

    # Per-tap validity masks: handle SAME zero-padding and the row wraparound
    # that flat (H*W) shifts would otherwise introduce. Trace-time constants.
    ys = np.arange(HW) // W
    xs = np.arange(HW) % W
    masks = np.zeros((9, HW), np.float32)
    t = 0
    for dy in (-1, 0, 1):
        for dx in (-1, 0, 1):
            masks[t] = ((ys + dy >= 0) & (ys + dy < H) &
                        (xs + dx >= 0) & (xs + dx < W)).astype(np.float32)
            t += 1
    masks = jnp.asarray(masks)

    # --- Repack weights at trace time: channel-major matrices, mid padded to
    # a multiple of 8, 3x3 weights in im2col layout, alpha folded into w3/b3.
    weight_args = []
    blocks = []
    for p in params:
        in_c = p["w1"].shape[2]
        mid = p["w1"].shape[3]
        out_c = p["w3"].shape[3]
        mid_p = _round_up(mid, 8)
        alpha = jnp.float32(p["alpha"]) if (rezero and "alpha" in p) else jnp.float32(1.0)

        w1 = jnp.zeros((mid_p, in_c), jnp.float32).at[:mid].set(p["w1"][0, 0].T)
        b1 = jnp.zeros((mid_p, 1), jnp.float32).at[:mid].set(p["b1"].reshape(mid, 1))

        w2m = jnp.zeros((mid_p, 9, mid_p), jnp.float32).at[:mid, :, :mid].set(
            jnp.transpose(p["w2"], (3, 0, 1, 2)).reshape(mid, 9, mid))
        w2m = w2m.reshape(mid_p, 9 * mid_p)
        b2 = jnp.zeros((mid_p, 1), jnp.float32).at[:mid].set(p["b2"].reshape(mid, 1))

        w3 = alpha * jnp.zeros((out_c, mid_p), jnp.float32).at[:, :mid].set(p["w3"][0, 0].T)
        b3 = (alpha * p["b3"]).reshape(out_c, 1)

        block_args = [w1, b1, w2m, b2, w3, b3]
        has_skip = "ws" in p
        if has_skip:
            block_args += [p["ws"][0, 0].T, p["bs"].reshape(out_c, 1)]
        weight_args += block_args
        blocks.append((mid_p, has_skip))

    midp_max = max(m for m, _ in blocks)
    pad_l = _round_up(W + 1, 128)              # aligned halo offset

    in_specs = [pl.BlockSpec((1, C_in, HW), lambda n: (n, 0, 0)),
                pl.BlockSpec(masks.shape, lambda n: (0, 0))]
    for wa in weight_args:
        in_specs.append(pl.BlockSpec(wa.shape, lambda n: (0, 0)))

    kernel = _make_stack_kernel(H, W, tuple(blocks), pad_l)
    out = pl.pallas_call(
        kernel,
        out_shape=jax.ShapeDtypeStruct((N, C_out, HW), x_nchw.dtype),
        grid=(N,),
        in_specs=in_specs,
        out_specs=pl.BlockSpec((1, C_out, HW), lambda n: (n, 0, 0)),
        scratch_shapes=[
            pltpu.VMEM((midp_max, HW + 2 * pad_l), jnp.float32),   # halo buf
            pltpu.VMEM((9 * midp_max, HW), jnp.float32),           # im2col slab
        ],
        compiler_params=pltpu.CompilerParams(
            dimension_semantics=("parallel",)),
    )(x, masks, *weight_args)
    return out.reshape(N, C_out, H, W)


# ----------------------------------------------------------------------------
# Parameter init (ReZero bottleneck, HWIO conv weights)
# ----------------------------------------------------------------------------
def init_bottleneck(key, in_c, out_c, rezero):
    mid = max(out_c // 2, 1)
    ks = jax.random.split(key, 4)

    def w_init(k, shape, fan_in):
        return jax.random.normal(k, shape, jnp.float32) / jnp.sqrt(jnp.float32(fan_in))

    p = dict(
        w1=w_init(ks[0], (1, 1, in_c, mid), in_c),
        b1=jnp.full((mid,), 0.01, jnp.float32),
        w2=w_init(ks[1], (3, 3, mid, mid), 9 * mid),
        b2=jnp.full((mid,), 0.01, jnp.float32),
        w3=w_init(ks[2], (1, 1, mid, out_c), mid),
        b3=jnp.full((out_c,), 0.01, jnp.float32),
    )
    if in_c != out_c:
        p["ws"] = w_init(ks[3], (1, 1, in_c, out_c), in_c)
        p["bs"] = jnp.full((out_c,), 0.01, jnp.float32)
    if rezero:
        # ReZero conventionally initializes alpha=0; use a nonzero value so the
        # branch convs actually contribute in this synthetic test.
        p["alpha"] = jnp.float32(0.25)
    return p


# ----------------------------------------------------------------------------
# Pure-JAX reference (NCHW) for verification
# ----------------------------------------------------------------------------
def _conv_ref(x, w, b):
    y = lax.conv_general_dilated(
        x, w, (1, 1), "SAME", dimension_numbers=("NCHW", "HWIO", "NCHW"))
    return y + b.reshape(1, -1, 1, 1)


def _bottleneck_ref(x, p, rezero):
    h = jnp.maximum(_conv_ref(x, p["w1"], p["b1"]), 0.0)
    h = jnp.maximum(_conv_ref(h, p["w2"], p["b2"]), 0.0)
    y = _conv_ref(h, p["w3"], p["b3"])
    skip = _conv_ref(x, p["ws"], p["bs"]) if "ws" in p else x
    alpha = p["alpha"] if rezero else 1.0
    return skip + alpha * y


if __name__ == "__main__":
    key = jax.random.PRNGKey(0)
    kx, k1, k2, k3 = jax.random.split(key, 4)

    N, C_IN, C_OUT, H, W = 2, 4, 8, 16, 16
    REZERO = True

    x = jax.random.normal(kx, (N, C_IN, H, W), jnp.float32)   # PyTorch NCHW
    params = [
        init_bottleneck(k1, C_IN, C_OUT, REZERO),
        init_bottleneck(k2, C_OUT, C_OUT, REZERO),
        init_bottleneck(k3, C_OUT, C_OUT, REZERO),
    ]

    out = stacked_bottleneck(x, params, REZERO)
    out = jax.block_until_ready(out)
    assert out.shape == (N, C_OUT, H, W)

    # Verify against pure-JAX reference.
    ref = x
    for p in params:
        ref = _bottleneck_ref(ref, p, REZERO)
    assert jnp.allclose(out, ref, atol=1e-3, rtol=1e-3), "mismatch vs reference"

    print("KERNEL_OK")
</pallas_src>

<mosaic_0001>
module attributes {stable_mosaic.version = 11 : i64} {
  func.func @kernel(%arg0: i32, %arg1: memref<1x4x256xf32, #tpu.memory_space<vmem>>, %arg2: memref<9x256xf32, #tpu.memory_space<vmem>>, %arg3: memref<8x4xf32, #tpu.memory_space<vmem>>, %arg4: memref<8x1xf32, #tpu.memory_space<vmem>>, %arg5: memref<8x72xf32, #tpu.memory_space<vmem>>, %arg6: memref<8x1xf32, #tpu.memory_space<vmem>>, %arg7: memref<8x8xf32, #tpu.memory_space<vmem>>, %arg8: memref<8x1xf32, #tpu.memory_space<vmem>>, %arg9: memref<8x4xf32, #tpu.memory_space<vmem>>, %arg10: memref<8x1xf32, #tpu.memory_space<vmem>>, %arg11: memref<8x8xf32, #tpu.memory_space<vmem>>, %arg12: memref<8x1xf32, #tpu.memory_space<vmem>>, %arg13: memref<8x72xf32, #tpu.memory_space<vmem>>, %arg14: memref<8x1xf32, #tpu.memory_space<vmem>>, %arg15: memref<8x8xf32, #tpu.memory_space<vmem>>, %arg16: memref<8x1xf32, #tpu.memory_space<vmem>>, %arg17: memref<8x8xf32, #tpu.memory_space<vmem>>, %arg18: memref<8x1xf32, #tpu.memory_space<vmem>>, %arg19: memref<8x72xf32, #tpu.memory_space<vmem>>, %arg20: memref<8x1xf32, #tpu.memory_space<vmem>>, %arg21: memref<8x8xf32, #tpu.memory_space<vmem>>, %arg22: memref<8x1xf32, #tpu.memory_space<vmem>>, %arg23: memref<1x8x256xf32, #tpu.memory_space<vmem>>, %arg24: memref<8x512xf32, #tpu.memory_space<vmem>>, %arg25: memref<72x256xf32, #tpu.memory_space<vmem>>) attributes {dimension_semantics = [#tpu.dimension_semantics<parallel>], iteration_bounds = array<i64: 2>, scalar_prefetch = 0 : i64, scratch_operands = 2 : i64, tpu.core_type = #tpu.core_type<tc>, window_params = [{transform_indices = @transform_0, window_bounds = array<i64: 1, 4, 256>}, {pipeline_mode = #tpu.pipeline_mode<synchronous>, transform_indices = @transform_1, window_bounds = array<i64: 9, 256>}, {pipeline_mode = #tpu.pipeline_mode<synchronous>, transform_indices = @transform_2, window_bounds = array<i64: 8, 4>}, {pipeline_mode = #tpu.pipeline_mode<synchronous>, transform_indices = @transform_3, window_bounds = array<i64: 8, 1>}, {pipeline_mode = #tpu.pipeline_mode<synchronous>, transform_indices = @transform_4, window_bounds = array<i64: 8, 72>}, {pipeline_mode = #tpu.pipeline_mode<synchronous>, transform_indices = @transform_5, window_bounds = array<i64: 8, 1>}, {pipeline_mode = #tpu.pipeline_mode<synchronous>, transform_indices = @transform_6, window_bounds = array<i64: 8, 8>}, {pipeline_mode = #tpu.pipeline_mode<synchronous>, transform_indices = @transform_7, window_bounds = array<i64: 8, 1>}, {pipeline_mode = #tpu.pipeline_mode<synchronous>, transform_indices = @transform_8, window_bounds = array<i64: 8, 4>}, {pipeline_mode = #tpu.pipeline_mode<synchronous>, transform_indices = @transform_9, window_bounds = array<i64: 8, 1>}, {pipeline_mode = #tpu.pipeline_mode<synchronous>, transform_indices = @transform_10, window_bounds = array<i64: 8, 8>}, {pipeline_mode = #tpu.pipeline_mode<synchronous>, transform_indices = @transform_11, window_bounds = array<i64: 8, 1>}, {pipeline_mode = #tpu.pipeline_mode<synchronous>, transform_indices = @transform_12, window_bounds = array<i64: 8, 72>}, {pipeline_mode = #tpu.pipeline_mode<synchronous>, transform_indices = @transform_13, window_bounds = array<i64: 8, 1>}, {pipeline_mode = #tpu.pipeline_mode<synchronous>, transform_indices = @transform_14, window_bounds = array<i64: 8, 8>}, {pipeline_mode = #tpu.pipeline_mode<synchronous>, transform_indices = @transform_15, window_bounds = array<i64: 8, 1>}, {pipeline_mode = #tpu.pipeline_mode<synchronous>, transform_indices = @transform_16, window_bounds = array<i64: 8, 8>}, {pipeline_mode = #tpu.pipeline_mode<synchronous>, transform_indices = @transform_17, window_bounds = array<i64: 8, 1>}, {pipeline_mode = #tpu.pipeline_mode<synchronous>, transform_indices = @transform_18, window_bounds = array<i64: 8, 72>}, {pipeline_mode = #tpu.pipeline_mode<synchronous>, transform_indices = @transform_19, window_bounds = array<i64: 8, 1>}, {pipeline_mode = #tpu.pipeline_mode<synchronous>, transform_indices = @transform_20, window_bounds = array<i64: 8, 8>}, {pipeline_mode = #tpu.pipeline_mode<synchronous>, transform_indices = @transform_21, window_bounds = array<i64: 8, 1>}, {transform_indices = @transform_22, window_bounds = array<i64: 1, 8, 256>}]} {
    %cst = arith.constant 0.000000e+00 : f32
    %0 = vector.broadcast %cst : f32 to vector<8x512xf32>
    %c0 = arith.constant 0 : index
    %c0_0 = arith.constant 0 : index
    %1 = vector.load %arg24[%c0, %c0_0] : memref<8x512xf32, #tpu.memory_space<vmem>>, vector<8x512xf32>
    tpu.vector_store %arg24[%c0, %c0_0], %0 {strides = array<i32>} : memref<8x512xf32, #tpu.memory_space<vmem>>, vector<8x512xf32>,
    %c0_1 = arith.constant 0 : index
    %c0_2 = arith.constant 0 : index
    %c0_3 = arith.constant 0 : index
    %2 = vector.load %arg1[%c0_1, %c0_2, %c0_3] : memref<1x4x256xf32, #tpu.memory_space<vmem>>, vector<1x4x256xf32>
    %3 = vector.shape_cast %2 : vector<1x4x256xf32> to vector<4x256xf32>
    %c0_4 = arith.constant 0 : index
    %c0_5 = arith.constant 0 : index
    %4 = vector.load %arg3[%c0_4, %c0_5] : memref<8x4xf32, #tpu.memory_space<vmem>>, vector<8x4xf32>
    %c0_6 = arith.constant 0 : index
    %c0_7 = arith.constant 0 : index
    %5 = vector.load %arg4[%c0_6, %c0_7] : memref<8x1xf32, #tpu.memory_space<vmem>>, vector<8x1xf32>
    %c0_8 = arith.constant 0 : index
    %c0_9 = arith.constant 0 : index
    %6 = vector.load %arg5[%c0_8, %c0_9] : memref<8x72xf32, #tpu.memory_space<vmem>>, vector<8x72xf32>
    %c0_10 = arith.constant 0 : index
    %c0_11 = arith.constant 0 : index
    %7 = vector.load %arg6[%c0_10, %c0_11] : memref<8x1xf32, #tpu.memory_space<vmem>>, vector<8x1xf32>
    %c0_12 = arith.constant 0 : index
    %c0_13 = arith.constant 0 : index
    %8 = vector.load %arg7[%c0_12, %c0_13] : memref<8x8xf32, #tpu.memory_space<vmem>>, vector<8x8xf32>
    %c0_14 = arith.constant 0 : index
    %c0_15 = arith.constant 0 : index
    %9 = vector.load %arg8[%c0_14, %c0_15] : memref<8x1xf32, #tpu.memory_space<vmem>>, vector<8x1xf32>
    %c0_16 = arith.constant 0 : index
    %c0_17 = arith.constant 0 : index
    %10 = vector.load %arg9[%c0_16, %c0_17] : memref<8x4xf32, #tpu.memory_space<vmem>>, vector<8x4xf32>
    %c0_18 = arith.constant 0 : index
    %c0_19 = arith.constant 0 : index
    %11 = vector.load %arg10[%c0_18, %c0_19] : memref<8x1xf32, #tpu.memory_space<vmem>>, vector<8x1xf32>
    %cst_20 = arith.constant dense<0.000000e+00> : vector<8x256xf32>
    %12 = tpu.matmul %10, %3, %cst_20 {dimension_numbers = #tpu.dot_dimension_numbers<[1], [0], [0], [1], [0, 0, 1, 1], [], []>} : vector<8x4xf32>, vector<4x256xf32>, vector<8x256xf32> -> vector<8x256xf32>
    %13 = vector.broadcast %11 : vector<8x1xf32> to vector<8x256xf32>
    %14 = arith.addf %12, %13 : vector<8x256xf32>
    %cst_21 = arith.constant dense<0.000000e+00> : vector<8x256xf32>
    %15 = tpu.matmul %4, %3, %cst_21 {dimension_numbers = #tpu.dot_dimension_numbers<[1], [0], [0], [1], [0, 0, 1, 1], [], []>} : vector<8x4xf32>, vector<4x256xf32>, vector<8x256xf32> -> vector<8x256xf32>
    %16 = vector.broadcast %5 : vector<8x1xf32> to vector<8x256xf32>
    %17 = arith.addf %15, %16 : vector<8x256xf32>
    %cst_22 = arith.constant 0.000000e+00 : f32
    %18 = vector.broadcast %cst_22 : f32 to vector<8x256xf32>
    %19 = arith.maximumf %17, %18 : vector<8x256xf32>
    %c0_23 = arith.constant 0 : index
    %c128 = arith.constant 128 : index
    %20 = vector.load %arg24[%c0_23, %c128] : memref<8x512xf32, #tpu.memory_space<vmem>>, vector<8x256xf32>
    tpu.vector_store %arg24[%c0_23, %c128], %19 {strides = array<i32>} : memref<8x512xf32, #tpu.memory_space<vmem>>, vector<8x256xf32>,
    %c0_24 = arith.constant 0 : index
    %c111 = arith.constant 111 : index
    %21 = vector.load %arg24[%c0_24, %c111] : memref<8x512xf32, #tpu.memory_space<vmem>>, vector<8x256xf32>
    %c0_25 = arith.constant 0 : index
    %c0_26 = arith.constant 0 : index
    %22 = vector.load %arg2[%c0_25, %c0_26] : memref<9x256xf32, #tpu.memory_space<vmem>>, vector<1x256xf32>
    %23 = vector.broadcast %22 : vector<1x256xf32> to vector<8x256xf32>
    %24 = arith.mulf %21, %23 : vector<8x256xf32>
    %c0_27 = arith.constant 0 : index
    %c0_28 = arith.constant 0 : index
    %25 = vector.load %arg25[%c0_27, %c0_28] : memref<72x256xf32, #tpu.memory_space<vmem>>, vector<8x256xf32>
    tpu.vector_store %arg25[%c0_27, %c0_28], %24 {strides = array<i32>} : memref<72x256xf32, #tpu.memory_space<vmem>>, vector<8x256xf32>,
    %c0_29 = arith.constant 0 : index
    %c112 = arith.constant 112 : index
    %26 = vector.load %arg24[%c0_29, %c112] : memref<8x512xf32, #tpu.memory_space<vmem>>, vector<8x256xf32>
    %c1 = arith.constant 1 : index
    %c0_30 = arith.constant 0 : index
    %27 = vector.load %arg2[%c1, %c0_30] : memref<9x256xf32, #tpu.memory_space<vmem>>, vector<1x256xf32>
    %28 = vector.broadcast %27 : vector<1x256xf32> to vector<8x256xf32>
    %29 = arith.mulf %26, %28 : vector<8x256xf32>
    %c8 = arith.constant 8 : index
    %c0_31 = arith.constant 0 : index
    %30 = vector.load %arg25[%c8, %c0_31] : memref<72x256xf32, #tpu.memory_space<vmem>>, vector<8x256xf32>
    tpu.vector_store %arg25[%c8, %c0_31], %29 {strides = array<i32>} : memref<72x256xf32, #tpu.memory_space<vmem>>, vector<8x256xf32>,
    %c0_32 = arith.constant 0 : index
    %c113 = arith.constant 113 : index
    %31 = vector.load %arg24[%c0_32, %c113] : memref<8x512xf32, #tpu.memory_space<vmem>>, vector<8x256xf32>
    %c2 = arith.constant 2 : index
    %c0_33 = arith.constant 0 : index
    %32 = vector.load %arg2[%c2, %c0_33] : memref<9x256xf32, #tpu.memory_space<vmem>>, vector<1x256xf32>
    %33 = vector.broadcast %32 : vector<1x256xf32> to vector<8x256xf32>
    %34 = arith.mulf %31, %33 : vector<8x256xf32>
    %c16 = arith.constant 16 : index
    %c0_34 = arith.constant 0 : index
    %35 = vector.load %arg25[%c16, %c0_34] : memref<72x256xf32, #tpu.memory_space<vmem>>, vector<8x256xf32>
    tpu.vector_store %arg25[%c16, %c0_34], %34 {strides = array<i32>} : memref<72x256xf32, #tpu.memory_space<vmem>>, vector<8x256xf32>,
    %c0_35 = arith.constant 0 : index
    %c127 = arith.constant 127 : index
    %36 = vector.load %arg24[%c0_35, %c127] : memref<8x512xf32, #tpu.memory_space<vmem>>, vector<8x256xf32>
    %c3 = arith.constant 3 : index
    %c0_36 = arith.constant 0 : index
    %37 = vector.load %arg2[%c3, %c0_36] : memref<9x256xf32, #tpu.memory_space<vmem>>, vector<1x256xf32>
    %38 = vector.broadcast %37 : vector<1x256xf32> to vector<8x256xf32>
    %39 = arith.mulf %36, %38 : vector<8x256xf32>
    %c24 = arith.constant 24 : index
    %c0_37 = arith.constant 0 : index
    %40 = vector.load %arg25[%c24, %c0_37] : memref<72x256xf32, #tpu.memory_space<vmem>>, vector<8x256xf32>
    tpu.vector_store %arg25[%c24, %c0_37], %39 {strides = array<i32>} : memref<72x256xf32, #tpu.memory_space<vmem>>, vector<8x256xf32>,
    %c0_38 = arith.constant 0 : index
    %c128_39 = arith.constant 128 : index
    %41 = vector.load %arg24[%c0_38, %c128_39] : memref<8x512xf32, #tpu.memory_space<vmem>>, vector<8x256xf32>
    %c4 = arith.constant 4 : index
    %c0_40 = arith.constant 0 : index
    %42 = vector.load %arg2[%c4, %c0_40] : memref<9x256xf32, #tpu.memory_space<vmem>>, vector<1x256xf32>
    %43 = vector.broadcast %42 : vector<1x256xf32> to vector<8x256xf32>
    %44 = arith.mulf %41, %43 : vector<8x256xf32>
    %c32 = arith.constant 32 : index
    %c0_41 = arith.constant 0 : index
    %45 = vector.load %arg25[%c32, %c0_41] : memref<72x256xf32, #tpu.memory_space<vmem>>, vector<8x256xf32>
    tpu.vector_store %arg25[%c32, %c0_41], %44 {strides = array<i32>} : memref<72x256xf32, #tpu.memory_space<vmem>>, vector<8x256xf32>,
    %c0_42 = arith.constant 0 : index
    %c129 = arith.constant 129 : index
    %46 = vector.load %arg24[%c0_42, %c129] : memref<8x512xf32, #tpu.memory_space<vmem>>, vector<8x256xf32>
    %c5 = arith.constant 5 : index
    %c0_43 = arith.constant 0 : index
    %47 = vector.load %arg2[%c5, %c0_43] : memref<9x256xf32, #tpu.memory_space<vmem>>, vector<1x256xf32>
    %48 = vector.broadcast %47 : vector<1x256xf32> to vector<8x256xf32>
    %49 = arith.mulf %46, %48 : vector<8x256xf32>
    %c40 = arith.constant 40 : index
    %c0_44 = arith.constant 0 : index
    %50 = vector.load %arg25[%c40, %c0_44] : memref<72x256xf32, #tpu.memory_space<vmem>>, vector<8x256xf32>
    tpu.vector_store %arg25[%c40, %c0_44], %49 {strides = array<i32>} : memref<72x256xf32, #tpu.memory_space<vmem>>, vector<8x256xf32>,
    %c0_45 = arith.constant 0 : index
    %c143 = arith.constant 143 : index
    %51 = vector.load %arg24[%c0_45, %c143] : memref<8x512xf32, #tpu.memory_space<vmem>>, vector<8x256xf32>
    %c6 = arith.constant 6 : index
    %c0_46 = arith.constant 0 : index
    %52 = vector.load %arg2[%c6, %c0_46] : memref<9x256xf32, #tpu.memory_space<vmem>>, vector<1x256xf32>
    %53 = vector.broadcast %52 : vector<1x256xf32> to vector<8x256xf32>
    %54 = arith.mulf %51, %53 : vector<8x256xf32>
    %c48 = arith.constant 48 : index
    %c0_47 = arith.constant 0 : index
    %55 = vector.load %arg25[%c48, %c0_47] : memref<72x256xf32, #tpu.memory_space<vmem>>, vector<8x256xf32>
    tpu.vector_store %arg25[%c48, %c0_47], %54 {strides = array<i32>} : memref<72x256xf32, #tpu.memory_space<vmem>>, vector<8x256xf32>,
    %c0_48 = arith.constant 0 : index
    %c144 = arith.constant 144 : index
    %56 = vector.load %arg24[%c0_48, %c144] : memref<8x512xf32, #tpu.memory_space<vmem>>, vector<8x256xf32>
    %c7 = arith.constant 7 : index
    %c0_49 = arith.constant 0 : index
    %57 = vector.load %arg2[%c7, %c0_49] : memref<9x256xf32, #tpu.memory_space<vmem>>, vector<1x256xf32>
    %58 = vector.broadcast %57 : vector<1x256xf32> to vector<8x256xf32>
    %59 = arith.mulf %56, %58 : vector<8x256xf32>
    %c56 = arith.constant 56 : index
    %c0_50 = arith.constant 0 : index
    %60 = vector.load %arg25[%c56, %c0_50] : memref<72x256xf32, #tpu.memory_space<vmem>>, vector<8x256xf32>
    tpu.vector_store %arg25[%c56, %c0_50], %59 {strides = array<i32>} : memref<72x256xf32, #tpu.memory_space<vmem>>, vector<8x256xf32>,
    %c0_51 = arith.constant 0 : index
    %c145 = arith.constant 145 : index
    %61 = vector.load %arg24[%c0_51, %c145] : memref<8x512xf32, #tpu.memory_space<vmem>>, vector<8x256xf32>
    %c8_52 = arith.constant 8 : index
    %c0_53 = arith.constant 0 : index
    %62 = vector.load %arg2[%c8_52, %c0_53] : memref<9x256xf32, #tpu.memory_space<vmem>>, vector<1x256xf32>
    %63 = vector.broadcast %62 : vector<1x256xf32> to vector<8x256xf32>
    %64 = arith.mulf %61, %63 : vector<8x256xf32>
    %c64 = arith.constant 64 : index
    %c0_54 = arith.constant 0 : index
    %65 = vector.load %arg25[%c64, %c0_54] : memref<72x256xf32, #tpu.memory_space<vmem>>, vector<8x256xf32>
    tpu.vector_store %arg25[%c64, %c0_54], %64 {strides = array<i32>} : memref<72x256xf32, #tpu.memory_space<vmem>>, vector<8x256xf32>,
    %c0_55 = arith.constant 0 : index
    %c0_56 = arith.constant 0 : index
    %66 = vector.load %arg25[%c0_55, %c0_56] : memref<72x256xf32, #tpu.memory_space<vmem>>, vector<72x256xf32>
    %cst_57 = arith.constant dense<0.000000e+00> : vector<8x256xf32>
    %67 = tpu.matmul %6, %66, %cst_57 {dimension_numbers = #tpu.dot_dimension_numbers<[1], [0], [0], [1], [0, 0, 1, 1], [], []>} : vector<8x72xf32>, vector<72x256xf32>, vector<8x256xf32> -> vector<8x256xf32>
    %68 = vector.broadcast %7 : vector<8x1xf32> to vector<8x256xf32>
    %69 = arith.addf %67, %68 : vector<8x256xf32>
    %cst_58 = arith.constant 0.000000e+00 : f32
    %70 = vector.broadcast %cst_58 : f32 to vector<8x256xf32>
    %71 = arith.maximumf %69, %70 : vector<8x256xf32>
    %cst_59 = arith.constant dense<0.000000e+00> : vector<8x256xf32>
    %72 = tpu.matmul %8, %71, %cst_59 {dimension_numbers = #tpu.dot_dimension_numbers<[1], [0], [0], [1], [0, 0, 1, 1], [], []>} : vector<8x8xf32>, vector<8x256xf32>, vector<8x256xf32> -> vector<8x256xf32>
    %73 = vector.broadcast %9 : vector<8x1xf32> to vector<8x256xf32>
    %74 = arith.addf %72, %73 : vector<8x256xf32>
    %75 = arith.addf %14, %74 : vector<8x256xf32>
    %c0_60 = arith.constant 0 : index
    %c0_61 = arith.constant 0 : index
    %76 = vector.load %arg11[%c0_60, %c0_61] : memref<8x8xf32, #tpu.memory_space<vmem>>, vector<8x8xf32>
    %c0_62 = arith.constant 0 : index
    %c0_63 = arith.constant 0 : index
    %77 = vector.load %arg12[%c0_62, %c0_63] : memref<8x1xf32, #tpu.memory_space<vmem>>, vector<8x1xf32>
    %c0_64 = arith.constant 0 : index
    %c0_65 = arith.constant 0 : index
    %78 = vector.load %arg13[%c0_64, %c0_65] : memref<8x72xf32, #tpu.memory_space<vmem>>, vector<8x72xf32>
    %c0_66 = arith.constant 0 : index
    %c0_67 = arith.constant 0 : index
    %79 = vector.load %arg14[%c0_66, %c0_67] : memref<8x1xf32, #tpu.memory_space<vmem>>, vector<8x1xf32>
    %c0_68 = arith.constant 0 : index
    %c0_69 = arith.constant 0 : index
    %80 = vector.load %arg15[%c0_68, %c0_69] : memref<8x8xf32, #tpu.memory_space<vmem>>, vector<8x8xf32>
    %c0_70 = arith.constant 0 : index
    %c0_71 = arith.constant 0 : index
    %81 = vector.load %arg16[%c0_70, %c0_71] : memref<8x1xf32, #tpu.memory_space<vmem>>, vector<8x1xf32>
    %cst_72 = arith.constant dense<0.000000e+00> : vector<8x256xf32>
    %82 = tpu.matmul %76, %75, %cst_72 {dimension_numbers = #tpu.dot_dimension_numbers<[1], [0], [0], [1], [0, 0, 1, 1], [], []>} : vector<8x8xf32>, vector<8x256xf32>, vector<8x256xf32> -> vector<8x256xf32>
    %83 = vector.broadcast %77 : vector<8x1xf32> to vector<8x256xf32>
    %84 = arith.addf %82, %83 : vector<8x256xf32>
    %cst_73 = arith.constant 0.000000e+00 : f32
    %85 = vector.broadcast %cst_73 : f32 to vector<8x256xf32>
    %86 = arith.maximumf %84, %85 : vector<8x256xf32>
    %c0_74 = arith.constant 0 : index
    %c128_75 = arith.constant 128 : index
    %87 = vector.load %arg24[%c0_74, %c128_75] : memref<8x512xf32, #tpu.memory_space<vmem>>, vector<8x256xf32>
    tpu.vector_store %arg24[%c0_74, %c128_75], %86 {strides = array<i32>} : memref<8x512xf32, #tpu.memory_space<vmem>>, vector<8x256xf32>,
    %c0_76 = arith.constant 0 : index
    %c111_77 = arith.constant 111 : index
    %88 = vector.load %arg24[%c0_76, %c111_77] : memref<8x512xf32, #tpu.memory_space<vmem>>, vector<8x256xf32>
    %c0_78 = arith.constant 0 : index
    %c0_79 = arith.constant 0 : index
    %89 = vector.load %arg2[%c0_78, %c0_79] : memref<9x256xf32, #tpu.memory_space<vmem>>, vector<1x256xf32>
    %90 = vector.broadcast %89 : vector<1x256xf32> to vector<8x256xf32>
    %91 = arith.mulf %88, %90 : vector<8x256xf32>
    %c0_80 = arith.constant 0 : index
    %c0_81 = arith.constant 0 : index
    %92 = vector.load %arg25[%c0_80, %c0_81] : memref<72x256xf32, #tpu.memory_space<vmem>>, vector<8x256xf32>
    tpu.vector_store %arg25[%c0_80, %c0_81], %91 {strides = array<i32>} : memref<72x256xf32, #tpu.memory_space<vmem>>, vector<8x256xf32>,
    %c0_82 = arith.constant 0 : index
    %c112_83 = arith.constant 112 : index
    %93 = vector.load %arg24[%c0_82, %c112_83] : memref<8x512xf32, #tpu.memory_space<vmem>>, vector<8x256xf32>
    %c1_84 = arith.constant 1 : index
    %c0_85 = arith.constant 0 : index
    %94 = vector.load %arg2[%c1_84, %c0_85] : memref<9x256xf32, #tpu.memory_space<vmem>>, vector<1x256xf32>
    %95 = vector.broadcast %94 : vector<1x256xf32> to vector<8x256xf32>
    %96 = arith.mulf %93, %95 : vector<8x256xf32>
    %c8_86 = arith.constant 8 : index
    %c0_87 = arith.constant 0 : index
    %97 = vector.load %arg25[%c8_86, %c0_87] : memref<72x256xf32, #tpu.memory_space<vmem>>, vector<8x256xf32>
    tpu.vector_store %arg25[%c8_86, %c0_87], %96 {strides = array<i32>} : memref<72x256xf32, #tpu.memory_space<vmem>>, vector<8x256xf32>,
    %c0_88 = arith.constant 0 : index
    %c113_89 = arith.constant 113 : index
    %98 = vector.load %arg24[%c0_88, %c113_89] : memref<8x512xf32, #tpu.memory_space<vmem>>, vector<8x256xf32>
    %c2_90 = arith.constant 2 : index
    %c0_91 = arith.constant 0 : index
    %99 = vector.load %arg2[%c2_90, %c0_91] : memref<9x256xf32, #tpu.memory_space<vmem>>, vector<1x256xf32>
    %100 = vector.broadcast %99 : vector<1x256xf32> to vector<8x256xf32>
    %101 = arith.mulf %98, %100 : vector<8x256xf32>
    %c16_92 = arith.constant 16 : index
    %c0_93 = arith.constant 0 : index
    %102 = vector.load %arg25[%c16_92, %c0_93] : memref<72x256xf32, #tpu.memory_space<vmem>>, vector<8x256xf32>
    tpu.vector_store %arg25[%c16_92, %c0_93], %101 {strides = array<i32>} : memref<72x256xf32, #tpu.memory_space<vmem>>, vector<8x256xf32>,
    %c0_94 = arith.constant 0 : index
    %c127_95 = arith.constant 127 : index
    %103 = vector.load %arg24[%c0_94, %c127_95] : memref<8x512xf32, #tpu.memory_space<vmem>>, vector<8x256xf32>
    %c3_96 = arith.constant 3 : index
    %c0_97 = arith.constant 0 : index
    %104 = vector.load %arg2[%c3_96, %c0_97] : memref<9x256xf32, #tpu.memory_space<vmem>>, vector<1x256xf32>
    %105 = vector.broadcast %104 : vector<1x256xf32> to vector<8x256xf32>
    %106 = arith.mulf %103, %105 : vector<8x256xf32>
    %c24_98 = arith.constant 24 : index
    %c0_99 = arith.constant 0 : index
    %107 = vector.load %arg25[%c24_98, %c0_99] : memref<72x256xf32, #tpu.memory_space<vmem>>, vector<8x256xf32>
    tpu.vector_store %arg25[%c24_98, %c0_99], %106 {strides = array<i32>} : memref<72x256xf32, #tpu.memory_space<vmem>>, vector<8x256xf32>,
    %c0_100 = arith.constant 0 : index
    %c128_101 = arith.constant 128 : index
    %108 = vector.load %arg24[%c0_100, %c128_101] : memref<8x512xf32, #tpu.memory_space<vmem>>, vector<8x256xf32>
    %c4_102 = arith.constant 4 : index
    %c0_103 = arith.constant 0 : index
    %109 = vector.load %arg2[%c4_102, %c0_103] : memref<9x256xf32, #tpu.memory_space<vmem>>, vector<1x256xf32>
    %110 = vector.broadcast %109 : vector<1x256xf32> to vector<8x256xf32>
    %111 = arith.mulf %108, %110 : vector<8x256xf32>
    %c32_104 = arith.constant 32 : index
    %c0_105 = arith.constant 0 : index
    %112 = vector.load %arg25[%c32_104, %c0_105] : memref<72x256xf32, #tpu.memory_space<vmem>>, vector<8x256xf32>
    tpu.vector_store %arg25[%c32_104, %c0_105], %111 {strides = array<i32>} : memref<72x256xf32, #tpu.memory_space<vmem>>, vector<8x256xf32>,
    %c0_106 = arith.constant 0 : index
    %c129_107 = arith.constant 129 : index
    %113 = vector.load %arg24[%c0_106, %c129_107] : memref<8x512xf32, #tpu.memory_space<vmem>>, vector<8x256xf32>
    %c5_108 = arith.constant 5 : index
    %c0_109 = arith.constant 0 : index
    %114 = vector.load %arg2[%c5_108, %c0_109] : memref<9x256xf32, #tpu.memory_space<vmem>>, vector<1x256xf32>
    %115 = vector.broadcast %114 : vector<1x256xf32> to vector<8x256xf32>
    %116 = arith.mulf %113, %115 : vector<8x256xf32>
    %c40_110 = arith.constant 40 : index
    %c0_111 = arith.constant 0 : index
    %117 = vector.load %arg25[%c40_110, %c0_111] : memref<72x256xf32, #tpu.memory_space<vmem>>, vector<8x256xf32>
    tpu.vector_store %arg25[%c40_110, %c0_111], %116 {strides = array<i32>} : memref<72x256xf32, #tpu.memory_space<vmem>>, vector<8x256xf32>,
    %c0_112 = arith.constant 0 : index
    %c143_113 = arith.constant 143 : index
    %118 = vector.load %arg24[%c0_112, %c143_113] : memref<8x512xf32, #tpu.memory_space<vmem>>, vector<8x256xf32>
    %c6_114 = arith.constant 6 : index
    %c0_115 = arith.constant 0 : index
    %119 = vector.load %arg2[%c6_114, %c0_115] : memref<9x256xf32, #tpu.memory_space<vmem>>, vector<1x256xf32>
    %120 = vector.broadcast %119 : vector<1x256xf32> to vector<8x256xf32>
    %121 = arith.mulf %118, %120 : vector<8x256xf32>
    %c48_116 = arith.constant 48 : index
    %c0_117 = arith.constant 0 : index
    %122 = vector.load %arg25[%c48_116, %c0_117] : memref<72x256xf32, #tpu.memory_space<vmem>>, vector<8x256xf32>
    tpu.vector_store %arg25[%c48_116, %c0_117], %121 {strides = array<i32>} : memref<72x256xf32, #tpu.memory_space<vmem>>, vector<8x256xf32>,
    %c0_118 = arith.constant 0 : index
    %c144_119 = arith.constant 144 : index
    %123 = vector.load %arg24[%c0_118, %c144_119] : memref<8x512xf32, #tpu.memory_space<vmem>>, vector<8x256xf32>
    %c7_120 = arith.constant 7 : index
    %c0_121 = arith.constant 0 : index
    %124 = vector.load %arg2[%c7_120, %c0_121] : memref<9x256xf32, #tpu.memory_space<vmem>>, vector<1x256xf32>
    %125 = vector.broadcast %124 : vector<1x256xf32> to vector<8x256xf32>
    %126 = arith.mulf %123, %125 : vector<8x256xf32>
    %c56_122 = arith.constant 56 : index
    %c0_123 = arith.constant 0 : index
    %127 = vector.load %arg25[%c56_122, %c0_123] : memref<72x256xf32, #tpu.memory_space<vmem>>, vector<8x256xf32>
    tpu.vector_store %arg25[%c56_122, %c0_123], %126 {strides = array<i32>} : memref<72x256xf32, #tpu.memory_space<vmem>>, vector<8x256xf32>,
    %c0_124 = arith.constant 0 : index
    %c145_125 = arith.constant 145 : index
    %128 = vector.load %arg24[%c0_124, %c145_125] : memref<8x512xf32, #tpu.memory_space<vmem>>, vector<8x256xf32>
    %c8_126 = arith.constant 8 : index
    %c0_127 = arith.constant 0 : index
    %129 = vector.load %arg2[%c8_126, %c0_127] : memref<9x256xf32, #tpu.memory_space<vmem>>, vector<1x256xf32>
    %130 = vector.broadcast %129 : vector<1x256xf32> to vector<8x256xf32>
    %131 = arith.mulf %128, %130 : vector<8x256xf32>
    %c64_128 = arith.constant 64 : index
    %c0_129 = arith.constant 0 : index
    %132 = vector.load %arg25[%c64_128, %c0_129] : memref<72x256xf32, #tpu.memory_space<vmem>>, vector<8x256xf32>
    tpu.vector_store %arg25[%c64_128, %c0_129], %131 {strides = array<i32>} : memref<72x256xf32, #tpu.memory_space<vmem>>, vector<8x256xf32>,
    %c0_130 = arith.constant 0 : index
    %c0_131 = arith.constant 0 : index
    %133 = vector.load %arg25[%c0_130, %c0_131] : memref<72x256xf32, #tpu.memory_space<vmem>>, vector<72x256xf32>
    %cst_132 = arith.constant dense<0.000000e+00> : vector<8x256xf32>
    %134 = tpu.matmul %78, %133, %cst_132 {dimension_numbers = #tpu.dot_dimension_numbers<[1], [0], [0], [1], [0, 0, 1, 1], [], []>} : vector<8x72xf32>, vector<72x256xf32>, vector<8x256xf32> -> vector<8x256xf32>
    %135 = vector.broadcast %79 : vector<8x1xf32> to vector<8x256xf32>
    %136 = arith.addf %134, %135 : vector<8x256xf32>
    %cst_133 = arith.constant 0.000000e+00 : f32
    %137 = vector.broadcast %cst_133 : f32 to vector<8x256xf32>
    %138 = arith.maximumf %136, %137 : vector<8x256xf32>
    %cst_134 = arith.constant dense<0.000000e+00> : vector<8x256xf32>
    %139 = tpu.matmul %80, %138, %cst_134 {dimension_numbers = #tpu.dot_dimension_numbers<[1], [0], [0], [1], [0, 0, 1, 1], [], []>} : vector<8x8xf32>, vector<8x256xf32>, vector<8x256xf32> -> vector<8x256xf32>
    %140 = vector.broadcast %81 : vector<8x1xf32> to vector<8x256xf32>
    %141 = arith.addf %139, %140 : vector<8x256xf32>
    %142 = arith.addf %75, %141 : vector<8x256xf32>
    %c0_135 = arith.constant 0 : index
    %c0_136 = arith.constant 0 : index
    %143 = vector.load %arg17[%c0_135, %c0_136] : memref<8x8xf32, #tpu.memory_space<vmem>>, vector<8x8xf32>
    %c0_137 = arith.constant 0 : index
    %c0_138 = arith.constant 0 : index
    %144 = vector.load %arg18[%c0_137, %c0_138] : memref<8x1xf32, #tpu.memory_space<vmem>>, vector<8x1xf32>
    %c0_139 = arith.constant 0 : index
    %c0_140 = arith.constant 0 : index
    %145 = vector.load %arg19[%c0_139, %c0_140] : memref<8x72xf32, #tpu.memory_space<vmem>>, vector<8x72xf32>
    %c0_141 = arith.constant 0 : index
    %c0_142 = arith.constant 0 : index
    %146 = vector.load %arg20[%c0_141, %c0_142] : memref<8x1xf32, #tpu.memory_space<vmem>>, vector<8x1xf32>
    %c0_143 = arith.constant 0 : index
    %c0_144 = arith.constant 0 : index
    %147 = vector.load %arg21[%c0_143, %c0_144] : memref<8x8xf32, #tpu.memory_space<vmem>>, vector<8x8xf32>
    %c0_145 = arith.constant 0 : index
    %c0_146 = arith.constant 0 : index
    %148 = vector.load %arg22[%c0_145, %c0_146] : memref<8x1xf32, #tpu.memory_space<vmem>>, vector<8x1xf32>
    %cst_147 = arith.constant dense<0.000000e+00> : vector<8x256xf32>
    %149 = tpu.matmul %143, %142, %cst_147 {dimension_numbers = #tpu.dot_dimension_numbers<[1], [0], [0], [1], [0, 0, 1, 1], [], []>} : vector<8x8xf32>, vector<8x256xf32>, vector<8x256xf32> -> vector<8x256xf32>
    %150 = vector.broadcast %144 : vector<8x1xf32> to vector<8x256xf32>
    %151 = arith.addf %149, %150 : vector<8x256xf32>
    %cst_148 = arith.constant 0.000000e+00 : f32
    %152 = vector.broadcast %cst_148 : f32 to vector<8x256xf32>
    %153 = arith.maximumf %151, %152 : vector<8x256xf32>
    %c0_149 = arith.constant 0 : index
    %c128_150 = arith.constant 128 : index
    %154 = vector.load %arg24[%c0_149, %c128_150] : memref<8x512xf32, #tpu.memory_space<vmem>>, vector<8x256xf32>
    tpu.vector_store %arg24[%c0_149, %c128_150], %153 {strides = array<i32>} : memref<8x512xf32, #tpu.memory_space<vmem>>, vector<8x256xf32>,
    %c0_151 = arith.constant 0 : index
    %c111_152 = arith.constant 111 : index
    %155 = vector.load %arg24[%c0_151, %c111_152] : memref<8x512xf32, #tpu.memory_space<vmem>>, vector<8x256xf32>
    %c0_153 = arith.constant 0 : index
    %c0_154 = arith.constant 0 : index
    %156 = vector.load %arg2[%c0_153, %c0_154] : memref<9x256xf32, #tpu.memory_space<vmem>>, vector<1x256xf32>
    %157 = vector.broadcast %156 : vector<1x256xf32> to vector<8x256xf32>
    %158 = arith.mulf %155, %157 : vector<8x256xf32>
    %c0_155 = arith.constant 0 : index
    %c0_156 = arith.constant 0 : index
    %159 = vector.load %arg25[%c0_155, %c0_156] : memref<72x256xf32, #tpu.memory_space<vmem>>, vector<8x256xf32>
    tpu.vector_store %arg25[%c0_155, %c0_156], %158 {strides = array<i32>} : memref<72x256xf32, #tpu.memory_space<vmem>>, vector<8x256xf32>,
    %c0_157 = arith.constant 0 : index
    %c112_158 = arith.constant 112 : index
    %160 = vector.load %arg24[%c0_157, %c112_158] : memref<8x512xf32, #tpu.memory_space<vmem>>, vector<8x256xf32>
    %c1_159 = arith.constant 1 : index
    %c0_160 = arith.constant 0 : index
    %161 = vector.load %arg2[%c1_159, %c0_160] : memref<9x256xf32, #tpu.memory_space<vmem>>, vector<1x256xf32>
    %162 = vector.broadcast %161 : vector<1x256xf32> to vector<8x256xf32>
    %163 = arith.mulf %160, %162 : vector<8x256xf32>
    %c8_161 = arith.constant 8 : index
    %c0_162 = arith.constant 0 : index
    %164 = vector.load %arg25[%c8_161, %c0_162] : memref<72x256xf32, #tpu.memory_space<vmem>>, vector<8x256xf32>
    tpu.vector_store %arg25[%c8_161, %c0_162], %163 {strides = array<i32>} : memref<72x256xf32, #tpu.memory_space<vmem>>, vector<8x256xf32>,
    %c0_163 = arith.constant 0 : index
    %c113_164 = arith.constant 113 : index
    %165 = vector.load %arg24[%c0_163, %c113_164] : memref<8x512xf32, #tpu.memory_space<vmem>>, vector<8x256xf32>
    %c2_165 = arith.constant 2 : index
    %c0_166 = arith.constant 0 : index
    %166 = vector.load %arg2[%c2_165, %c0_166] : memref<9x256xf32, #tpu.memory_space<vmem>>, vector<1x256xf32>
    %167 = vector.broadcast %166 : vector<1x256xf32> to vector<8x256xf32>
    %168 = arith.mulf %165, %167 : vector<8x256xf32>
    %c16_167 = arith.constant 16 : index
    %c0_168 = arith.constant 0 : index
    %169 = vector.load %arg25[%c16_167, %c0_168] : memref<72x256xf32, #tpu.memory_space<vmem>>, vector<8x256xf32>
    tpu.vector_store %arg25[%c16_167, %c0_168], %168 {strides = array<i32>} : memref<72x256xf32, #tpu.memory_space<vmem>>, vector<8x256xf32>,
    %c0_169 = arith.constant 0 : index
    %c127_170 = arith.constant 127 : index
    %170 = vector.load %arg24[%c0_169, %c127_170] : memref<8x512xf32, #tpu.memory_space<vmem>>, vector<8x256xf32>
    %c3_171 = arith.constant 3 : index
    %c0_172 = arith.constant 0 : index
    %171 = vector.load %arg2[%c3_171, %c0_172] : memref<9x256xf32, #tpu.memory_space<vmem>>, vector<1x256xf32>
    %172 = vector.broadcast %171 : vector<1x256xf32> to vector<8x256xf32>
    %173 = arith.mulf %170, %172 : vector<8x256xf32>
    %c24_173 = arith.constant 24 : index
    %c0_174 = arith.constant 0 : index
    %174 = vector.load %arg25[%c24_173, %c0_174] : memref<72x256xf32, #tpu.memory_space<vmem>>, vector<8x256xf32>
    tpu.vector_store %arg25[%c24_173, %c0_174], %173 {strides = array<i32>} : memref<72x256xf32, #tpu.memory_space<vmem>>, vector<8x256xf32>,
    %c0_175 = arith.constant 0 : index
    %c128_176 = arith.constant 128 : index
    %175 = vector.load %arg24[%c0_175, %c128_176] : memref<8x512xf32, #tpu.memory_space<vmem>>, vector<8x256xf32>
    %c4_177 = arith.constant 4 : index
    %c0_178 = arith.constant 0 : index
    %176 = vector.load %arg2[%c4_177, %c0_178] : memref<9x256xf32, #tpu.memory_space<vmem>>, vector<1x256xf32>
    %177 = vector.broadcast %176 : vector<1x256xf32> to vector<8x256xf32>
    %178 = arith.mulf %175, %177 : vector<8x256xf32>
    %c32_179 = arith.constant 32 : index
    %c0_180 = arith.constant 0 : index
    %179 = vector.load %arg25[%c32_179, %c0_180] : memref<72x256xf32, #tpu.memory_space<vmem>>, vector<8x256xf32>
    tpu.vector_store %arg25[%c32_179, %c0_180], %178 {strides = array<i32>} : memref<72x256xf32, #tpu.memory_space<vmem>>, vector<8x256xf32>,
    %c0_181 = arith.constant 0 : index
    %c129_182 = arith.constant 129 : index
    %180 = vector.load %arg24[%c0_181, %c129_182] : memref<8x512xf32, #tpu.memory_space<vmem>>, vector<8x256xf32>
    %c5_183 = arith.constant 5 : index
    %c0_184 = arith.constant 0 : index
    %181 = vector.load %arg2[%c5_183, %c0_184] : memref<9x256xf32, #tpu.memory_space<vmem>>, vector<1x256xf32>
    %182 = vector.broadcast %181 : vector<1x256xf32> to vector<8x256xf32>
    %183 = arith.mulf %180, %182 : vector<8x256xf32>
    %c40_185 = arith.constant 40 : index
    %c0_186 = arith.constant 0 : index
    %184 = vector.load %arg25[%c40_185, %c0_186] : memref<72x256xf32, #tpu.memory_space<vmem>>, vector<8x256xf32>
    tpu.vector_store %arg25[%c40_185, %c0_186], %183 {strides = array<i32>} : memref<72x256xf32, #tpu.memory_space<vmem>>, vector<8x256xf32>,
    %c0_187 = arith.constant 0 : index
    %c143_188 = arith.constant 143 : index
    %185 = vector.load %arg24[%c0_187, %c143_188] : memref<8x512xf32, #tpu.memory_space<vmem>>, vector<8x256xf32>
    %c6_189 = arith.constant 6 : index
    %c0_190 = arith.constant 0 : index
    %186 = vector.load %arg2[%c6_189, %c0_190] : memref<9x256xf32, #tpu.memory_space<vmem>>, vector<1x256xf32>
    %187 = vector.broadcast %186 : vector<1x256xf32> to vector<8x256xf32>
    %188 = arith.mulf %185, %187 : vector<8x256xf32>
    %c48_191 = arith.constant 48 : index
    %c0_192 = arith.constant 0 : index
    %189 = vector.load %arg25[%c48_191, %c0_192] : memref<72x256xf32, #tpu.memory_space<vmem>>, vector<8x256xf32>
    tpu.vector_store %arg25[%c48_191, %c0_192], %188 {strides = array<i32>} : memref<72x256xf32, #tpu.memory_space<vmem>>, vector<8x256xf32>,
    %c0_193 = arith.constant 0 : index
    %c144_194 = arith.constant 144 : index
    %190 = vector.load %arg24[%c0_193, %c144_194] : memref<8x512xf32, #tpu.memory_space<vmem>>, vector<8x256xf32>
    %c7_195 = arith.constant 7 : index
    %c0_196 = arith.constant 0 : index
    %191 = vector.load %arg2[%c7_195, %c0_196] : memref<9x256xf32, #tpu.memory_space<vmem>>, vector<1x256xf32>
    %192 = vector.broadcast %191 : vector<1x256xf32> to vector<8x256xf32>
    %193 = arith.mulf %190, %192 : vector<8x256xf32>
    %c56_197 = arith.constant 56 : index
    %c0_198 = arith.constant 0 : index
    %194 = vector.load %arg25[%c56_197, %c0_198] : memref<72x256xf32, #tpu.memory_space<vmem>>, vector<8x256xf32>
    tpu.vector_store %arg25[%c56_197, %c0_198], %193 {strides = array<i32>} : memref<72x256xf32, #tpu.memory_space<vmem>>, vector<8x256xf32>,
    %c0_199 = arith.constant 0 : index
    %c145_200 = arith.constant 145 : index
    %195 = vector.load %arg24[%c0_199, %c145_200] : memref<8x512xf32, #tpu.memory_space<vmem>>, vector<8x256xf32>
    %c8_201 = arith.constant 8 : index
    %c0_202 = arith.constant 0 : index
    %196 = vector.load %arg2[%c8_201, %c0_202] : memref<9x256xf32, #tpu.memory_space<vmem>>, vector<1x256xf32>
    %197 = vector.broadcast %196 : vector<1x256xf32> to vector<8x256xf32>
    %198 = arith.mulf %195, %197 : vector<8x256xf32>
    %c64_203 = arith.constant 64 : index
    %c0_204 = arith.constant 0 : index
    %199 = vector.load %arg25[%c64_203, %c0_204] : memref<72x256xf32, #tpu.memory_space<vmem>>, vector<8x256xf32>
    tpu.vector_store %arg25[%c64_203, %c0_204], %198 {strides = array<i32>} : memref<72x256xf32, #tpu.memory_space<vmem>>, vector<8x256xf32>,
    %c0_205 = arith.constant 0 : index
    %c0_206 = arith.constant 0 : index
    %200 = vector.load %arg25[%c0_205, %c0_206] : memref<72x256xf32, #tpu.memory_space<vmem>>, vector<72x256xf32>
    %cst_207 = arith.constant dense<0.000000e+00> : vector<8x256xf32>
    %201 = tpu.matmul %145, %200, %cst_207 {dimension_numbers = #tpu.dot_dimension_numbers<[1], [0], [0], [1], [0, 0, 1, 1], [], []>} : vector<8x72xf32>, vector<72x256xf32>, vector<8x256xf32> -> vector<8x256xf32>
    %202 = vector.broadcast %146 : vector<8x1xf32> to vector<8x256xf32>
    %203 = arith.addf %201, %202 : vector<8x256xf32>
    %cst_208 = arith.constant 0.000000e+00 : f32
    %204 = vector.broadcast %cst_208 : f32 to vector<8x256xf32>
    %205 = arith.maximumf %203, %204 : vector<8x256xf32>
    %cst_209 = arith.constant dense<0.000000e+00> : vector<8x256xf32>
    %206 = tpu.matmul %147, %205, %cst_209 {dimension_numbers = #tpu.dot_dimension_numbers<[1], [0], [0], [1], [0, 0, 1, 1], [], []>} : vector<8x8xf32>, vector<8x256xf32>, vector<8x256xf32> -> vector<8x256xf32>
    %207 = vector.broadcast %148 : vector<8x1xf32> to vector<8x256xf32>
    %208 = arith.addf %206, %207 : vector<8x256xf32>
    %209 = arith.addf %142, %208 : vector<8x256xf32>
    %c0_210 = arith.constant 0 : index
    %c0_211 = arith.constant 0 : index
    %c0_212 = arith.constant 0 : index
    %210 = vector.load %arg23[%c0_210, %c0_211, %c0_212] : memref<1x8x256xf32, #tpu.memory_space<vmem>>, vector<1x8x256xf32>
    %211 = vector.shape_cast %210 : vector<1x8x256xf32> to vector<8x256xf32>
    %212 = vector.shape_cast %209 : vector<8x256xf32> to vector<1x8x256xf32>
    tpu.vector_store %arg23[%c0_210, %c0_211, %c0_212], %212 {strides = array<i32>} : memref<1x8x256xf32, #tpu.memory_space<vmem>>, vector<1x8x256xf32>,
    return
  }
  func.func @transform_0(%arg0: i32) -> (i32, i32, i32) {
    %c0_i32 = arith.constant 0 : i32
    %c0_i32_0 = arith.constant 0 : i32
    %c0_i32_1 = arith.constant 0 : i32
    return %arg0, %c0_i32, %c0_i32_0 : i32, i32, i32
  }
  func.func @transform_1(%arg0: i32) -> (i32, i32) {
    %c0_i32 = arith.constant 0 : i32
    %c0_i32_0 = arith.constant 0 : i32
    %c0_i32_1 = arith.constant 0 : i32
    return %c0_i32, %c0_i32_0 : i32, i32
  }
  func.func @transform_2(%arg0: i32) -> (i32, i32) {
    %c0_i32 = arith.constant 0 : i32
    %c0_i32_0 = arith.constant 0 : i32
    %c0_i32_1 = arith.constant 0 : i32
    return %c0_i32, %c0_i32_0 : i32, i32
  }
  func.func @transform_3(%arg0: i32) -> (i32, i32) {
    %c0_i32 = arith.constant 0 : i32
    %c0_i32_0 = arith.constant 0 : i32
    %c0_i32_1 = arith.constant 0 : i32
    return %c0_i32, %c0_i32_0 : i32, i32
  }
  func.func @transform_4(%arg0: i32) -> (i32, i32) {
    %c0_i32 = arith.constant 0 : i32
    %c0_i32_0 = arith.constant 0 : i32
    %c0_i32_1 = arith.constant 0 : i32
    return %c0_i32, %c0_i32_0 : i32, i32
  }
  func.func @transform_5(%arg0: i32) -> (i32, i32) {
    %c0_i32 = arith.constant 0 : i32
    %c0_i32_0 = arith.constant 0 : i32
    %c0_i32_1 = arith.constant 0 : i32
    return %c0_i32, %c0_i32_0 : i32, i32
  }
  func.func @transform_6(%arg0: i32) -> (i32, i32) {
    %c0_i32 = arith.constant 0 : i32
    %c0_i32_0 = arith.constant 0 : i32
    %c0_i32_1 = arith.constant 0 : i32
    return %c0_i32, %c0_i32_0 : i32, i32
  }
  func.func @transform_7(%arg0: i32) -> (i32, i32) {
    %c0_i32 = arith.constant 0 : i32
    %c0_i32_0 = arith.constant 0 : i32
    %c0_i32_1 = arith.constant 0 : i32
    return %c0_i32, %c0_i32_0 : i32, i32
  }
  func.func @transform_8(%arg0: i32) -> (i32, i32) {
    %c0_i32 = arith.constant 0 : i32
    %c0_i32_0 = arith.constant 0 : i32
    %c0_i32_1 = arith.constant 0 : i32
    return %c0_i32, %c0_i32_0 : i32, i32
  }
  func.func @transform_9(%arg0: i32) -> (i32, i32) {
    %c0_i32 = arith.constant 0 : i32
    %c0_i32_0 = arith.constant 0 : i32
    %c0_i32_1 = arith.constant 0 : i32
    return %c0_i32, %c0_i32_0 : i32, i32
  }
  func.func @transform_10(%arg0: i32) -> (i32, i32) {
    %c0_i32 = arith.constant 0 : i32
    %c0_i32_0 = arith.constant 0 : i32
    %c0_i32_1 = arith.constant 0 : i32
    return %c0_i32, %c0_i32_0 : i32, i32
  }
  func.func @transform_11(%arg0: i32) -> (i32, i32) {
    %c0_i32 = arith.constant 0 : i32
    %c0_i32_0 = arith.constant 0 : i32
    %c0_i32_1 = arith.constant 0 : i32
    return %c0_i32, %c0_i32_0 : i32, i32
  }
  func.func @transform_12(%arg0: i32) -> (i32, i32) {
    %c0_i32 = arith.constant 0 : i32
    %c0_i32_0 = arith.constant 0 : i32
    %c0_i32_1 = arith.constant 0 : i32
    return %c0_i32, %c0_i32_0 : i32, i32
  }
  func.func @transform_13(%arg0: i32) -> (i32, i32) {
    %c0_i32 = arith.constant 0 : i32
    %c0_i32_0 = arith.constant 0 : i32
    %c0_i32_1 = arith.constant 0 : i32
    return %c0_i32, %c0_i32_0 : i32, i32
  }
  func.func @transform_14(%arg0: i32) -> (i32, i32) {
    %c0_i32 = arith.constant 0 : i32
    %c0_i32_0 = arith.constant 0 : i32
    %c0_i32_1 = arith.constant 0 : i32
    return %c0_i32, %c0_i32_0 : i32, i32
  }
  func.func @transform_15(%arg0: i32) -> (i32, i32) {
    %c0_i32 = arith.constant 0 : i32
    %c0_i32_0 = arith.constant 0 : i32
    %c0_i32_1 = arith.constant 0 : i32
    return %c0_i32, %c0_i32_0 : i32, i32
  }
  func.func @transform_16(%arg0: i32) -> (i32, i32) {
    %c0_i32 = arith.constant 0 : i32
    %c0_i32_0 = arith.constant 0 : i32
    %c0_i32_1 = arith.constant 0 : i32
    return %c0_i32, %c0_i32_0 : i32, i32
  }
  func.func @transform_17(%arg0: i32) -> (i32, i32) {
    %c0_i32 = arith.constant 0 : i32
    %c0_i32_0 = arith.constant 0 : i32
    %c0_i32_1 = arith.constant 0 : i32
    return %c0_i32, %c0_i32_0 : i32, i32
  }
  func.func @transform_18(%arg0: i32) -> (i32, i32) {
    %c0_i32 = arith.constant 0 : i32
    %c0_i32_0 = arith.constant 0 : i32
    %c0_i32_1 = arith.constant 0 : i32
    return %c0_i32, %c0_i32_0 : i32, i32
  }
  func.func @transform_19(%arg0: i32) -> (i32, i32) {
    %c0_i32 = arith.constant 0 : i32
    %c0_i32_0 = arith.constant 0 : i32
    %c0_i32_1 = arith.constant 0 : i32
    return %c0_i32, %c0_i32_0 : i32, i32
  }
  func.func @transform_20(%arg0: i32) -> (i32, i32) {
    %c0_i32 = arith.constant 0 : i32
    %c0_i32_0 = arith.constant 0 : i32
    %c0_i32_1 = arith.constant 0 : i32
    return %c0_i32, %c0_i32_0 : i32, i32
  }
  func.func @transform_21(%arg0: i32) -> (i32, i32) {
    %c0_i32 = arith.constant 0 : i32
    %c0_i32_0 = arith.constant 0 : i32
    %c0_i32_1 = arith.constant 0 : i32
    return %c0_i32, %c0_i32_0 : i32, i32
  }
  func.func @transform_22(%arg0: i32) -> (i32, i32, i32) {
    %c0_i32 = arith.constant 0 : i32
    %c0_i32_0 = arith.constant 0 : i32
    %c0_i32_1 = arith.constant 0 : i32
    return %arg0, %c0_i32, %c0_i32_0 : i32, i32, i32
  }
}

</mosaic_0001>

<llo_original>
// kernel: tpu_custom_call.1
$region0: #{tpu_custom_call.1}
  #allocation0 [shape = 'u32[]', space=smem, size = 0x4, offset = 0x4, fixed_abs, tag = 'smem constant byte address 0x4 - core index']
  #allocation1 [shape = 'u32[72,128]{1,0:T(1,128)}', space=vmem, size = 0x9000, scoped, tag = 'internal scratch']
  #allocation2 [shape = 'f32[8,512]{1,0:T(8,128)}', space=vmem, size = 0x4000, scoped, tag = 'scratch operand']
  #allocation3 [shape = 'f32[72,256]{1,0:T(8,128)}', space=vmem, size = 0x12000, scoped, tag = 'scratch operand']
  %s0 = inlined_call_operand.vmem [shape: f32[2,4,256], index: 0, kind: input, shape index: {}]
  %s1 = inlined_call_operand.hbm [shape: f32[9,256], index: 1, kind: input, shape index: {}]
  %s2 = inlined_call_operand.vmem [shape: f32[8,4], index: 2, kind: input, shape index: {}]
  %s3 = inlined_call_operand.vmem [shape: f32[8,1], index: 3, kind: input, shape index: {}]
  %s4 = inlined_call_operand.vmem [shape: f32[8,72], index: 4, kind: input, shape index: {}]
  %s5 = inlined_call_operand.vmem [shape: f32[8,1], index: 5, kind: input, shape index: {}]
  %s6 = inlined_call_operand.vmem [shape: f32[8,8], index: 6, kind: input, shape index: {}]
  %s7 = inlined_call_operand.vmem [shape: f32[8,1], index: 7, kind: input, shape index: {}]
  %s8 = inlined_call_operand.vmem [shape: f32[8,4], index: 8, kind: input, shape index: {}]
  %s9 = inlined_call_operand.vmem [shape: f32[8,1], index: 9, kind: input, shape index: {}]
  %s10 = inlined_call_operand.vmem [shape: f32[8,8], index: 10, kind: input, shape index: {}]
  %s11 = inlined_call_operand.vmem [shape: f32[8,1], index: 11, kind: input, shape index: {}]
  %s12 = inlined_call_operand.vmem [shape: f32[8,72], index: 12, kind: input, shape index: {}]
  %s13 = inlined_call_operand.vmem [shape: f32[8,1], index: 13, kind: input, shape index: {}]
  %s14 = inlined_call_operand.vmem [shape: f32[8,8], index: 14, kind: input, shape index: {}]
  %s15 = inlined_call_operand.vmem [shape: f32[8,1], index: 15, kind: input, shape index: {}]
  %s16 = inlined_call_operand.vmem [shape: f32[8,8], index: 16, kind: input, shape index: {}]
  %s17 = inlined_call_operand.vmem [shape: f32[8,1], index: 17, kind: input, shape index: {}]
  %s18 = inlined_call_operand.vmem [shape: f32[8,72], index: 18, kind: input, shape index: {}]
  %s19 = inlined_call_operand.vmem [shape: f32[8,1], index: 19, kind: input, shape index: {}]
  %s20 = inlined_call_operand.vmem [shape: f32[8,8], index: 20, kind: input, shape index: {}]
  %s21 = inlined_call_operand.vmem [shape: f32[8,1], index: 21, kind: input, shape index: {}]
  %s22 = inlined_call_operand.hbm [shape: f32[2,8,256], index: 22, kind: output, shape index: {}]
  %s23 = sld [smem:[#allocation0]]
  $region125: #{tpu_custom_call.1} parent=0
    _
  %s25 = ssub.s32 1, %s23
  %s26 = scalar_select 0, %s25, %s23
  $region1: #{tpu_custom_call.1} parent=0
    #allocation4 [shape = 'u8[16384]{0}', space=vmem, size = 0x4000, scoped, tag = 'input window, operand 1, single buffered']
    #allocation5 [shape = 's32[2]{0}', space=sflag, size = 0x8, scoped, tag = 'scoped memory for tpu_custom_call.1']
    #allocation6 [shape = 's32[2]{0}', space=sflag, size = 0x8, scoped, tag = 'scoped memory for tpu_custom_call.1']
    #allocation7 [shape = 'u8[16384]{0}', space=vmem, size = 0x4000, scoped, tag = 'output window, operand 0']
    %27 = vsyncpa [#allocation5], 0
    %28 = vsyncpa [#allocation6], 0
    %s29 = scalar_lea.sflag [#allocation6], 1
    %30 = vsyncpa %s29, 0
    loop: start=0, step=1, limit=4
    $region2: #{tpu_custom_call.1} parent=1 // loop_pre_header
      _
    $region3: #{tpu_custom_call.1} parent=1 // loop_header
      %s32 = sphi 0, %s36
      %p33 = scmp.ge.s32.totalorder %s32, 4
      %s42 = sphi 0, %s44
      %s45 = sphi 0, %s42
      %s46 = sphi 0, %s45
      %s62 = sphi 0, %s46
      %s66 = sphi 0, %s66
      %s68 = sphi 0, %s66
      %s69 = sphi 0, %s68
      %s83 = sphi 0, %s69
      %s87 = sphi 0, %s87
      %s89 = sphi 0, %s87
      %s90 = sphi 0, %s89
      %s104 = sphi 0, %s90
      %s108 = sphi 0, %s108
      %s110 = sphi 0, %s108
      %s111 = sphi 0, %s110
      %s125 = sphi 0, %s111
      %s129 = sphi 0, %s129
      %s131 = sphi 0, %s129
      %s132 = sphi 0, %s131
      %s146 = sphi 0, %s132
      %s150 = sphi 0, %s150
      %s152 = sphi 0, %s150
      %s153 = sphi 0, %s152
      %s167 = sphi 0, %s153
      %s171 = sphi 0, %s171
      %s173 = sphi 0, %s171
      %s174 = sphi 0, %s173
      %s188 = sphi 0, %s174
      %s192 = sphi 0, %s192
      %s194 = sphi 0, %s192
      %s195 = sphi 0, %s194
      %s209 = sphi 0, %s195
      %s213 = sphi 0, %s213
      %s215 = sphi 0, %s213
      %s216 = sphi 0, %s215
      %s230 = sphi 0, %s216
      %s234 = sphi 0, %s234
      %s236 = sphi 0, %s234
      %s237 = sphi 0, %s236
      %s251 = sphi 0, %s237
      %s255 = sphi 0, %s255
      %s257 = sphi 0, %s255
      %s258 = sphi 0, %s257
      %s272 = sphi 0, %s258
      %s276 = sphi 0, %s276
      %s278 = sphi 0, %s276
      %s279 = sphi 0, %s278
      %s293 = sphi 0, %s279
      %s297 = sphi 0, %s297
      %s299 = sphi 0, %s297
      %s300 = sphi 0, %s299
      %s314 = sphi 0, %s300
      %s318 = sphi 0, %s318
      %s320 = sphi 0, %s318
      %s321 = sphi 0, %s320
      %s335 = sphi 0, %s321
      %s339 = sphi 0, %s339
      %s341 = sphi 0, %s339
      %s342 = sphi 0, %s341
      %s356 = sphi 0, %s342
      %s360 = sphi 0, %s360
      %s362 = sphi 0, %s360
      %s363 = sphi 0, %s362
      %s377 = sphi 0, %s363
      %s381 = sphi 0, %s381
      %s383 = sphi 0, %s381
      %s384 = sphi 0, %s383
      %s398 = sphi 0, %s384
      %s402 = sphi 0, %s402
      %s404 = sphi 0, %s402
      %s405 = sphi 0, %s404
      %s419 = sphi 0, %s405
      %s423 = sphi 0, %s423
      %s425 = sphi 0, %s423
      %s426 = sphi 0, %s425
      %s440 = sphi 0, %s426
      %s444 = sphi 0, %s444
      %s446 = sphi 0, %s444
      %s447 = sphi 0, %s446
      %s461 = sphi 0, %s447
      %s465 = sphi 0, %s465
      %s467 = sphi 0, %s465
      %s468 = sphi 0, %s467
      %s482 = sphi 0, %s468
      %s486 = sphi 0, %s486
      %s488 = sphi 0, %s486
      %s489 = sphi 0, %s488
      %s503 = sphi 0, %s489
      %s509 = sphi 0, %s511
      %s512 = sphi 0, %s509
      %s513 = sphi 0, %s512
      %s529 = sphi 0, %s513
    $region4: #{tpu_custom_call.1} parent=1 // loop_header_branch
      %35 = sbr.rel (%p33) target = $region8
    $region5: #{tpu_custom_call.1} parent=1 // loop_body
      %s37 = ssub.s32 %s32, 1
      %s38 = ssub.s32 %s32, 2
      %s39 = sadd.s32 %s32, 1
      %s40 = ssub.s32 %s32, %s39
      %p41 = scmp.eq.s32.totalorder %s40, 0
      %s43 = sadd.s32 %s42, 1
      %s44 = scalar_select %p41, %s42, %s43
      %p47 = pneg %p41
      %p48 = scmp.eq.s32.totalorder %s32, 1
      %p49 = por %p47, %p48
      %p50 = scmp.ne.s32.totalorder %s42, %s45
      %p51 = scmp.eq.s32.totalorder %s32, 0
      %p52 = por %p50, %p51
      %p53 = scmp.ne.s32.totalorder %s42, %s45
      %p54 = scmp.eq.s32.totalorder %s37, 1
      %p55 = por %p53, %p54
      %p56 = scmp.ne.s32.totalorder %s45, %s46
      %p57 = scmp.eq.s32.totalorder %s37, 0
      %p58 = por %p56, %p57
      %p59 = scmp.ne.s32.totalorder %s45, %s46
      %p60 = scmp.eq.s32.totalorder %s38, 1
      %p61 = por %p59, %p60
      %p63 = scmp.ne.s32.totalorder %s46, %s62
      %p64 = scmp.eq.s32.totalorder %s38, 0
      %p65 = por %p63, %p64
      %s67 = sadd.s32 %s66, 1
      %p70 = scmp.eq.s32.totalorder %s32, 1
      %p71 = scmp.ne.s32.totalorder %s66, %s68
      %p72 = scmp.eq.s32.totalorder %s32, 0
      %p73 = por %p71, %p72
      %p74 = scmp.ne.s32.totalorder %s66, %s68
      %p75 = scmp.eq.s32.totalorder %s37, 1
      %p76 = por %p74, %p75
      %p77 = scmp.ne.s32.totalorder %s68, %s69
      %p78 = scmp.eq.s32.totalorder %s37, 0
      %p79 = por %p77, %p78
      %p80 = scmp.ne.s32.totalorder %s68, %s69
      %p81 = scmp.eq.s32.totalorder %s38, 1
      %p82 = por %p80, %p81
      %p84 = scmp.ne.s32.totalorder %s69, %s83
      %p85 = scmp.eq.s32.totalorder %s38, 0
      %p86 = por %p84, %p85
      %s88 = sadd.s32 %s87, 1
      %p91 = scmp.eq.s32.totalorder %s32, 1
      %p92 = scmp.ne.s32.totalorder %s87, %s89
      %p93 = scmp.eq.s32.totalorder %s32, 0
      %p94 = por %p92, %p93
      %p95 = scmp.ne.s32.totalorder %s87, %s89
      %p96 = scmp.eq.s32.totalorder %s37, 1
      %p97 = por %p95, %p96
      %p98 = scmp.ne.s32.totalorder %s89, %s90
      %p99 = scmp.eq.s32.totalorder %s37, 0
      %p100 = por %p98, %p99
      %p101 = scmp.ne.s32.totalorder %s89, %s90
      %p102 = scmp.eq.s32.totalorder %s38, 1
      %p103 = por %p101, %p102
      %p105 = scmp.ne.s32.totalorder %s90, %s104
      %p106 = scmp.eq.s32.totalorder %s38, 0
      %p107 = por %p105, %p106
      %s109 = sadd.s32 %s108, 1
      %p112 = scmp.eq.s32.totalorder %s32, 1
      %p113 = scmp.ne.s32.totalorder %s108, %s110
      %p114 = scmp.eq.s32.totalorder %s32, 0
      %p115 = por %p113, %p114
      %p116 = scmp.ne.s32.totalorder %s108, %s110
      %p117 = scmp.eq.s32.totalorder %s37, 1
      %p118 = por %p116, %p117
      %p119 = scmp.ne.s32.totalorder %s110, %s111
      %p120 = scmp.eq.s32.totalorder %s37, 0
      %p121 = por %p119, %p120
      %p122 = scmp.ne.s32.totalorder %s110, %s111
      %p123 = scmp.eq.s32.totalorder %s38, 1
      %p124 = por %p122, %p123
      %p126 = scmp.ne.s32.totalorder %s111, %s125
      %p127 = scmp.eq.s32.totalorder %s38, 0
      %p128 = por %p126, %p127
      %s130 = sadd.s32 %s129, 1
      %p133 = scmp.eq.s32.totalorder %s32, 1
      %p134 = scmp.ne.s32.totalorder %s129, %s131
      %p135 = scmp.eq.s32.totalorder %s32, 0
      %p136 = por %p134, %p135
      %p137 = scmp.ne.s32.totalorder %s129, %s131
      %p138 = scmp.eq.s32.totalorder %s37, 1
      %p139 = por %p137, %p138
      %p140 = scmp.ne.s32.totalorder %s131, %s132
      %p141 = scmp.eq.s32.totalorder %s37, 0
      %p142 = por %p140, %p141
      %p143 = scmp.ne.s32.totalorder %s131, %s132
      %p144 = scmp.eq.s32.totalorder %s38, 1
      %p145 = por %p143, %p144
      %p147 = scmp.ne.s32.totalorder %s132, %s146
      %p148 = scmp.eq.s32.totalorder %s38, 0
      %p149 = por %p147, %p148
      %s151 = sadd.s32 %s150, 1
      %p154 = scmp.eq.s32.totalorder %s32, 1
      %p155 = scmp.ne.s32.totalorder %s150, %s152
      %p156 = scmp.eq.s32.totalorder %s32, 0
      %p157 = por %p155, %p156
      %p158 = scmp.ne.s32.totalorder %s150, %s152
      %p159 = scmp.eq.s32.totalorder %s37, 1
      %p160 = por %p158, %p159
      %p161 = scmp.ne.s32.totalorder %s152, %s153
      %p162 = scmp.eq.s32.totalorder %s37, 0
      %p163 = por %p161, %p162
      %p164 = scmp.ne.s32.totalorder %s152, %s153
      %p165 = scmp.eq.s32.totalorder %s38, 1
      %p166 = por %p164, %p165
      %p168 = scmp.ne.s32.totalorder %s153, %s167
      %p169 = scmp.eq.s32.totalorder %s38, 0
      %p170 = por %p168, %p169
      %s172 = sadd.s32 %s171, 1
      %p175 = scmp.eq.s32.totalorder %s32, 1
      %p176 = scmp.ne.s32.totalorder %s171, %s173
      %p177 = scmp.eq.s32.totalorder %s32, 0
      %p178 = por %p176, %p177
      %p179 = scmp.ne.s32.totalorder %s171, %s173
      %p180 = scmp.eq.s32.totalorder %s37, 1
      %p181 = por %p179, %p180
      %p182 = scmp.ne.s32.totalorder %s173, %s174
      %p183 = scmp.eq.s32.totalorder %s37, 0
      %p184 = por %p182, %p183
      %p185 = scmp.ne.s32.totalorder %s173, %s174
      %p186 = scmp.eq.s32.totalorder %s38, 1
      %p187 = por %p185, %p186
      %p189 = scmp.ne.s32.totalorder %s174, %s188
      %p190 = scmp.eq.s32.totalorder %s38, 0
      %p191 = por %p189, %p190
      %s193 = sadd.s32 %s192, 1
      %p196 = scmp.eq.s32.totalorder %s32, 1
      %p197 = scmp.ne.s32.totalorder %s192, %s194
      %p198 = scmp.eq.s32.totalorder %s32, 0
      %p199 = por %p197, %p198
      %p200 = scmp.ne.s32.totalorder %s192, %s194
      %p201 = scmp.eq.s32.totalorder %s37, 1
      %p202 = por %p200, %p201
      %p203 = scmp.ne.s32.totalorder %s194, %s195
      %p204 = scmp.eq.s32.totalorder %s37, 0
      %p205 = por %p203, %p204
      %p206 = scmp.ne.s32.totalorder %s194, %s195
      %p207 = scmp.eq.s32.totalorder %s38, 1
      %p208 = por %p206, %p207
      %p210 = scmp.ne.s32.totalorder %s195, %s209
      %p211 = scmp.eq.s32.totalorder %s38, 0
      %p212 = por %p210, %p211
      %s214 = sadd.s32 %s213, 1
      %p217 = scmp.eq.s32.totalorder %s32, 1
      %p218 = scmp.ne.s32.totalorder %s213, %s215
      %p219 = scmp.eq.s32.totalorder %s32, 0
      %p220 = por %p218, %p219
      %p221 = scmp.ne.s32.totalorder %s213, %s215
      %p222 = scmp.eq.s32.totalorder %s37, 1
      %p223 = por %p221, %p222
      %p224 = scmp.ne.s32.totalorder %s215, %s216
      %p225 = scmp.eq.s32.totalorder %s37, 0
      %p226 = por %p224, %p225
      %p227 = scmp.ne.s32.totalorder %s215, %s216
      %p228 = scmp.eq.s32.totalorder %s38, 1
      %p229 = por %p227, %p228
      %p231 = scmp.ne.s32.totalorder %s216, %s230
      %p232 = scmp.eq.s32.totalorder %s38, 0
      %p233 = por %p231, %p232
      %s235 = sadd.s32 %s234, 1
      %p238 = scmp.eq.s32.totalorder %s32, 1
      %p239 = scmp.ne.s32.totalorder %s234, %s236
      %p240 = scmp.eq.s32.totalorder %s32, 0
      %p241 = por %p239, %p240
      %p242 = scmp.ne.s32.totalorder %s234, %s236
      %p243 = scmp.eq.s32.totalorder %s37, 1
      %p244 = por %p242, %p243
      %p245 = scmp.ne.s32.totalorder %s236, %s237
      %p246 = scmp.eq.s32.totalorder %s37, 0
      %p247 = por %p245, %p246
      %p248 = scmp.ne.s32.totalorder %s236, %s237
      %p249 = scmp.eq.s32.totalorder %s38, 1
      %p250 = por %p248, %p249
      %p252 = scmp.ne.s32.totalorder %s237, %s251
      %p253 = scmp.eq.s32.totalorder %s38, 0
      %p254 = por %p252, %p253
      %s256 = sadd.s32 %s255, 1
      %p259 = scmp.eq.s32.totalorder %s32, 1
      %p260 = scmp.ne.s32.totalorder %s255, %s257
      %p261 = scmp.eq.s32.totalorder %s32, 0
      %p262 = por %p260, %p261
      %p263 = scmp.ne.s32.totalorder %s255, %s257
      %p264 = scmp.eq.s32.totalorder %s37, 1
      %p265 = por %p263, %p264
      %p266 = scmp.ne.s32.totalorder %s257, %s258
      %p267 = scmp.eq.s32.totalorder %s37, 0
      %p268 = por %p266, %p267
      %p269 = scmp.ne.s32.totalorder %s257, %s258
      %p270 = scmp.eq.s32.totalorder %s38, 1
      %p271 = por %p269, %p270
      %p273 = scmp.ne.s32.totalorder %s258, %s272
      %p274 = scmp.eq.s32.totalorder %s38, 0
      %p275 = por %p273, %p274
      %s277 = sadd.s32 %s276, 1
      %p280 = scmp.eq.s32.totalorder %s32, 1
      %p281 = scmp.ne.s32.totalorder %s276, %s278
      %p282 = scmp.eq.s32.totalorder %s32, 0
      %p283 = por %p281, %p282
      %p284 = scmp.ne.s32.totalorder %s276, %s278
      %p285 = scmp.eq.s32.totalorder %s37, 1
      %p286 = por %p284, %p285
      %p287 = scmp.ne.s32.totalorder %s278, %s279
      %p288 = scmp.eq.s32.totalorder %s37, 0
      %p289 = por %p287, %p288
      %p290 = scmp.ne.s32.totalorder %s278, %s279
      %p291 = scmp.eq.s32.totalorder %s38, 1
      %p292 = por %p290, %p291
      %p294 = scmp.ne.s32.totalorder %s279, %s293
      %p295 = scmp.eq.s32.totalorder %s38, 0
      %p296 = por %p294, %p295
      %s298 = sadd.s32 %s297, 1
      %p301 = scmp.eq.s32.totalorder %s32, 1
      %p302 = scmp.ne.s32.totalorder %s297, %s299
      %p303 = scmp.eq.s32.totalorder %s32, 0
      %p304 = por %p302, %p303
      %p305 = scmp.ne.s32.totalorder %s297, %s299
      %p306 = scmp.eq.s32.totalorder %s37, 1
      %p307 = por %p305, %p306
      %p308 = scmp.ne.s32.totalorder %s299, %s300
      %p309 = scmp.eq.s32.totalorder %s37, 0
      %p310 = por %p308, %p309
      %p311 = scmp.ne.s32.totalorder %s299, %s300
      %p312 = scmp.eq.s32.totalorder %s38, 1
      %p313 = por %p311, %p312
      %p315 = scmp.ne.s32.totalorder %s300, %s314
      %p316 = scmp.eq.s32.totalorder %s38, 0
      %p317 = por %p315, %p316
      %s319 = sadd.s32 %s318, 1
      %p322 = scmp.eq.s32.totalorder %s32, 1
      %p323 = scmp.ne.s32.totalorder %s318, %s320
      %p324 = scmp.eq.s32.totalorder %s32, 0
      %p325 = por %p323, %p324
      %p326 = scmp.ne.s32.totalorder %s318, %s320
      %p327 = scmp.eq.s32.totalorder %s37, 1
      %p328 = por %p326, %p327
      %p329 = scmp.ne.s32.totalorder %s320, %s321
      %p330 = scmp.eq.s32.totalorder %s37, 0
      %p331 = por %p329, %p330
      %p332 = scmp.ne.s32.totalorder %s320, %s321
      %p333 = scmp.eq.s32.totalorder %s38, 1
      %p334 = por %p332, %p333
      %p336 = scmp.ne.s32.totalorder %s321, %s335
      %p337 = scmp.eq.s32.totalorder %s38, 0
      %p338 = por %p336, %p337
      %s340 = sadd.s32 %s339, 1
      %p343 = scmp.eq.s32.totalorder %s32, 1
      %p344 = scmp.ne.s32.totalorder %s339, %s341
      %p345 = scmp.eq.s32.totalorder %s32, 0
      %p346 = por %p344, %p345
      %p347 = scmp.ne.s32.totalorder %s339, %s341
      %p348 = scmp.eq.s32.totalorder %s37, 1
      %p349 = por %p347, %p348
      %p350 = scmp.ne.s32.totalorder %s341, %s342
      %p351 = scmp.eq.s32.totalorder %s37, 0
      %p352 = por %p350, %p351
      %p353 = scmp.ne.s32.totalorder %s341, %s342
      %p354 = scmp.eq.s32.totalorder %s38, 1
      %p355 = por %p353, %p354
      %p357 = scmp.ne.s32.totalorder %s342, %s356
      %p358 = scmp.eq.s32.totalorder %s38, 0
      %p359 = por %p357, %p358
      %s361 = sadd.s32 %s360, 1
      %p364 = scmp.eq.s32.totalorder %s32, 1
      %p365 = scmp.ne.s32.totalorder %s360, %s362
      %p366 = scmp.eq.s32.totalorder %s32, 0
      %p367 = por %p365, %p366
      %p368 = scmp.ne.s32.totalorder %s360, %s362
      %p369 = scmp.eq.s32.totalorder %s37, 1
      %p370 = por %p368, %p369
      %p371 = scmp.ne.s32.totalorder %s362, %s363
      %p372 = scmp.eq.s32.totalorder %s37, 0
      %p373 = por %p371, %p372
      %p374 = scmp.ne.s32.totalorder %s362, %s363
      %p375 = scmp.eq.s32.totalorder %s38, 1
      %p376 = por %p374, %p375
      %p378 = scmp.ne.s32.totalorder %s363, %s377
      %p379 = scmp.eq.s32.totalorder %s38, 0
      %p380 = por %p378, %p379
      %s382 = sadd.s32 %s381, 1
      %p385 = scmp.eq.s32.totalorder %s32, 1
      %p386 = scmp.ne.s32.totalorder %s381, %s383
      %p387 = scmp.eq.s32.totalorder %s32, 0
      %p388 = por %p386, %p387
      %p389 = scmp.ne.s32.totalorder %s381, %s383
      %p390 = scmp.eq.s32.totalorder %s37, 1
      %p391 = por %p389, %p390
      %p392 = scmp.ne.s32.totalorder %s383, %s384
      %p393 = scmp.eq.s32.totalorder %s37, 0
      %p394 = por %p392, %p393
      %p395 = scmp.ne.s32.totalorder %s383, %s384
      %p396 = scmp.eq.s32.totalorder %s38, 1
      %p397 = por %p395, %p396
      %p399 = scmp.ne.s32.totalorder %s384, %s398
      %p400 = scmp.eq.s32.totalorder %s38, 0
      %p401 = por %p399, %p400
      %s403 = sadd.s32 %s402, 1
      %p406 = scmp.eq.s32.totalorder %s32, 1
      %p407 = scmp.ne.s32.totalorder %s402, %s404
      %p408 = scmp.eq.s32.totalorder %s32, 0
      %p409 = por %p407, %p408
      %p410 = scmp.ne.s32.totalorder %s402, %s404
      %p411 = scmp.eq.s32.totalorder %s37, 1
      %p412 = por %p410, %p411
      %p413 = scmp.ne.s32.totalorder %s404, %s405
      %p414 = scmp.eq.s32.totalorder %s37, 0
      %p415 = por %p413, %p414
      %p416 = scmp.ne.s32.totalorder %s404, %s405
      %p417 = scmp.eq.s32.totalorder %s38, 1
      %p418 = por %p416, %p417
      %p420 = scmp.ne.s32.totalorder %s405, %s419
      %p421 = scmp.eq.s32.totalorder %s38, 0
      %p422 = por %p420, %p421
      %s424 = sadd.s32 %s423, 1
      %p427 = scmp.eq.s32.totalorder %s32, 1
      %p428 = scmp.ne.s32.totalorder %s423, %s425
      %p429 = scmp.eq.s32.totalorder %s32, 0
      %p430 = por %p428, %p429
      %p431 = scmp.ne.s32.totalorder %s423, %s425
      %p432 = scmp.eq.s32.totalorder %s37, 1
      %p433 = por %p431, %p432
      %p434 = scmp.ne.s32.totalorder %s425, %s426
      %p435 = scmp.eq.s32.totalorder %s37, 0
      %p436 = por %p434, %p435
      %p437 = scmp.ne.s32.totalorder %s425, %s426
      %p438 = scmp.eq.s32.totalorder %s38, 1
      %p439 = por %p437, %p438
      %p441 = scmp.ne.s32.totalorder %s426, %s440
      %p442 = scmp.eq.s32.totalorder %s38, 0
      %p443 = por %p441, %p442
      %s445 = sadd.s32 %s444, 1
      %p448 = scmp.eq.s32.totalorder %s32, 1
      %p449 = scmp.ne.s32.totalorder %s444, %s446
      %p450 = scmp.eq.s32.totalorder %s32, 0
      %p451 = por %p449, %p450
      %p452 = scmp.ne.s32.totalorder %s444, %s446
      %p453 = scmp.eq.s32.totalorder %s37, 1
      %p454 = por %p452, %p453
      %p455 = scmp.ne.s32.totalorder %s446, %s447
      %p456 = scmp.eq.s32.totalorder %s37, 0
      %p457 = por %p455, %p456
      %p458 = scmp.ne.s32.totalorder %s446, %s447
      %p459 = scmp.eq.s32.totalorder %s38, 1
      %p460 = por %p458, %p459
      %p462 = scmp.ne.s32.totalorder %s447, %s461
      %p463 = scmp.eq.s32.totalorder %s38, 0
      %p464 = por %p462, %p463
      %s466 = sadd.s32 %s465, 1
      %p469 = scmp.eq.s32.totalorder %s32, 1
      %p470 = scmp.ne.s32.totalorder %s465, %s467
      %p471 = scmp.eq.s32.totalorder %s32, 0
      %p472 = por %p470, %p471
      %p473 = scmp.ne.s32.totalorder %s465, %s467
      %p474 = scmp.eq.s32.totalorder %s37, 1
      %p475 = por %p473, %p474
      %p476 = scmp.ne.s32.totalorder %s467, %s468
      %p477 = scmp.eq.s32.totalorder %s37, 0
      %p478 = por %p476, %p477
      %p479 = scmp.ne.s32.totalorder %s467, %s468
      %p480 = scmp.eq.s32.totalorder %s38, 1
      %p481 = por %p479, %p480
      %p483 = scmp.ne.s32.totalorder %s468, %s482
      %p484 = scmp.eq.s32.totalorder %s38, 0
      %p485 = por %p483, %p484
      %s487 = sadd.s32 %s486, 1
      %p490 = scmp.eq.s32.totalorder %s32, 1
      %p491 = scmp.ne.s32.totalorder %s486, %s488
      %p492 = scmp.eq.s32.totalorder %s32, 0
      %p493 = por %p491, %p492
      %p494 = scmp.ne.s32.totalorder %s486, %s488
      %p495 = scmp.eq.s32.totalorder %s37, 1
      %p496 = por %p494, %p495
      %p497 = scmp.ne.s32.totalorder %s488, %s489
      %p498 = scmp.eq.s32.totalorder %s37, 0
      %p499 = por %p497, %p498
      %p500 = scmp.ne.s32.totalorder %s488, %s489
      %p501 = scmp.eq.s32.totalorder %s38, 1
      %p502 = por %p500, %p501
      %p504 = scmp.ne.s32.totalorder %s489, %s503
      %p505 = scmp.eq.s32.totalorder %s38, 0
      %p506 = por %p504, %p505
      %s507 = ssub.s32 %s32, %s39
      %p508 = scmp.eq.s32.totalorder %s507, 0
      %s510 = sadd.s32 %s509, 1
      %s511 = scalar_select %p508, %s509, %s510
      %p514 = pneg %p508
      %p515 = scmp.eq.s32.totalorder %s32, 1
      %p516 = por %p514, %p515
      %p517 = scmp.ne.s32.totalorder %s509, %s512
      %p518 = scmp.eq.s32.totalorder %s32, 0
      %p519 = por %p517, %p518
      %p520 = scmp.ne.s32.totalorder %s509, %s512
      %p521 = scmp.eq.s32.totalorder %s37, 1
      %p522 = por %p520, %p521
      %p523 = scmp.ne.s32.totalorder %s512, %s513
      %p524 = scmp.eq.s32.totalorder %s37, 0
      %p525 = por %p523, %p524
      %p526 = scmp.ne.s32.totalorder %s512, %s513
      %p527 = scmp.eq.s32.totalorder %s38, 1
      %p528 = por %p526, %p527
      %p530 = scmp.ne.s32.totalorder %s513, %s529
      %p531 = scmp.eq.s32.totalorder %s38, 0
      %p532 = por %p530, %p531
      %p533 = scmp.le.s32.totalorder 1, %s32
      %p534 = scmp.lt.s32.totalorder %s32, 3
      %p535 = pnand %p533, %p534
      %p536 = pneg %p535
      // Predicated region
      $region9: #{tpu_custom_call.1} parent=5 // pred_check
        _
      $region10: #{tpu_custom_call.1} parent=5 // pred_check_branch
        %538 = sbr.rel (%p535) target = $region12
      $region11: #{tpu_custom_call.1} parent=5 // pred_region
        %s539 = ssub.s32 %s32, 1
        // Predicated region
        $region13: #{tpu_custom_call.1} parent=11 // pred_check
          %p540 = pneg %p79
        $region14: #{tpu_custom_call.1} parent=11 // pred_check_branch
          %542 = sbr.rel (%p540) target = $region16
        $region15: #{tpu_custom_call.1} parent=11 // pred_region
          %544 = vsyncadd [#allocation5], 0
          %s545 = sshll.u32 %s1, 4
          %s546 = int_to_ptr.hbm [resolvable:$true] %s545
          %s547 = sshll.u32 [#allocation4], 4
          %s548 = int_to_ptr.vmem [resolvable:$true] %s547
          %553 = dma.hbm_to_vmem [thread:$0]  %s546, 512, %s548, [#allocation5], 256, 256, 16
        $region16: #{tpu_custom_call.1} parent=11 // pred_fallthru
          _
        // Predicated region
        $region17: #{tpu_custom_call.1} parent=11 // pred_check
          %p554 = pneg %p100
        $region18: #{tpu_custom_call.1} parent=11 // pred_check_branch
          %556 = sbr.rel (%p554) target = $region20
        $region19: #{tpu_custom_call.1} parent=11 // pred_region
          _
        $region20: #{tpu_custom_call.1} parent=11 // pred_fallthru
          _
        // Predicated region
        $region21: #{tpu_custom_call.1} parent=11 // pred_check
          %p557 = pneg %p121
        $region22: #{tpu_custom_call.1} parent=11 // pred_check_branch
          %559 = sbr.rel (%p557) target = $region24
        $region23: #{tpu_custom_call.1} parent=11 // pred_region
          _
        $region24: #{tpu_custom_call.1} parent=11 // pred_fallthru
          _
        // Predicated region
        $region25: #{tpu_custom_call.1} parent=11 // pred_check
          %p560 = pneg %p142
        $region26: #{tpu_custom_call.1} parent=11 // pred_check_branch
          %562 = sbr.rel (%p560) target = $region28
        $region27: #{tpu_custom_call.1} parent=11 // pred_region
          _
        $region28: #{tpu_custom_call.1} parent=11 // pred_fallthru
          _
        // Predicated region
        $region29: #{tpu_custom_call.1} parent=11 // pred_check
          %p563 = pneg %p163
        $region30: #{tpu_custom_call.1} parent=11 // pred_check_branch
          %565 = sbr.rel (%p563) target = $region32
        $region31: #{tpu_custom_call.1} parent=11 // pred_region
          _
        $region32: #{tpu_custom_call.1} parent=11 // pred_fallthru
          _
        // Predicated region
        $region33: #{tpu_custom_call.1} parent=11 // pred_check
          %p566 = pneg %p184
        $region34: #{tpu_custom_call.1} parent=11 // pred_check_branch
          %568 = sbr.rel (%p566) target = $region36
        $region35: #{tpu_custom_call.1} parent=11 // pred_region
          _
        $region36: #{tpu_custom_call.1} parent=11 // pred_fallthru
          _
        // Predicated region
        $region37: #{tpu_custom_call.1} parent=11 // pred_check
          %p569 = pneg %p205
        $region38: #{tpu_custom_call.1} parent=11 // pred_check_branch
          %571 = sbr.rel (%p569) target = $region40
        $region39: #{tpu_custom_call.1} parent=11 // pred_region
          _
        $region40: #{tpu_custom_call.1} parent=11 // pred_fallthru
          _
        // Predicated region
        $region41: #{tpu_custom_call.1} parent=11 // pred_check
          %p572 = pneg %p226
        $region42: #{tpu_custom_call.1} parent=11 // pred_check_branch
          %574 = sbr.rel (%p572) target = $region44
        $region43: #{tpu_custom_call.1} parent=11 // pred_region
          _
        $region44: #{tpu_custom_call.1} parent=11 // pred_fallthru
          _
        // Predicated region
        $region45: #{tpu_custom_call.1} parent=11 // pred_check
          %p575 = pneg %p247
        $region46: #{tpu_custom_call.1} parent=11 // pred_check_branch
          %577 = sbr.rel (%p575) target = $region48
        $region47: #{tpu_custom_call.1} parent=11 // pred_region
          _
        $region48: #{tpu_custom_call.1} parent=11 // pred_fallthru
          _
        // Predicated region
        $region49: #{tpu_custom_call.1} parent=11 // pred_check
          %p578 = pneg %p268
        $region50: #{tpu_custom_call.1} parent=11 // pred_check_branch
          %580 = sbr.rel (%p578) target = $region52
        $region51: #{tpu_custom_call.1} parent=11 // pred_region
          _
        $region52: #{tpu_custom_call.1} parent=11 // pred_fallthru
          _
        // Predicated region
        $region53: #{tpu_custom_call.1} parent=11 // pred_check
          %p581 = pneg %p289
        $region54: #{tpu_custom_call.1} parent=11 // pred_check_branch
          %583 = sbr.rel (%p581) target = $region56
        $region55: #{tpu_custom_call.1} parent=11 // pred_region
          _
        $region56: #{tpu_custom_call.1} parent=11 // pred_fallthru
          _
        // Predicated region
        $region57: #{tpu_custom_call.1} parent=11 // pred_check
          %p584 = pneg %p310
        $region58: #{tpu_custom_call.1} parent=11 // pred_check_branch
          %586 = sbr.rel (%p584) target = $region60
        $region59: #{tpu_custom_call.1} parent=11 // pred_region
          _
        $region60: #{tpu_custom_call.1} parent=11 // pred_fallthru
          _
        // Predicated region
        $region61: #{tpu_custom_call.1} parent=11 // pred_check
          %p587 = pneg %p331
        $region62: #{tpu_custom_call.1} parent=11 // pred_check_branch
          %589 = sbr.rel (%p587) target = $region64
        $region63: #{tpu_custom_call.1} parent=11 // pred_region
          _
        $region64: #{tpu_custom_call.1} parent=11 // pred_fallthru
          _
        // Predicated region
        $region65: #{tpu_custom_call.1} parent=11 // pred_check
          %p590 = pneg %p352
        $region66: #{tpu_custom_call.1} parent=11 // pred_check_branch
          %592 = sbr.rel (%p590) target = $region68
        $region67: #{tpu_custom_call.1} parent=11 // pred_region
          _
        $region68: #{tpu_custom_call.1} parent=11 // pred_fallthru
          _
        // Predicated region
        $region69: #{tpu_custom_call.1} parent=11 // pred_check
          %p593 = pneg %p373
        $region70: #{tpu_custom_call.1} parent=11 // pred_check_branch
          %595 = sbr.rel (%p593) target = $region72
        $region71: #{tpu_custom_call.1} parent=11 // pred_region
          _
        $region72: #{tpu_custom_call.1} parent=11 // pred_fallthru
          _
        // Predicated region
        $region73: #{tpu_custom_call.1} parent=11 // pred_check
          %p596 = pneg %p394
        $region74: #{tpu_custom_call.1} parent=11 // pred_check_branch
          %598 = sbr.rel (%p596) target = $region76
        $region75: #{tpu_custom_call.1} parent=11 // pred_region
          _
        $region76: #{tpu_custom_call.1} parent=11 // pred_fallthru
          _
        // Predicated region
        $region77: #{tpu_custom_call.1} parent=11 // pred_check
          %p599 = pneg %p415
        $region78: #{tpu_custom_call.1} parent=11 // pred_check_branch
          %601 = sbr.rel (%p599) target = $region80
        $region79: #{tpu_custom_call.1} parent=11 // pred_region
          _
        $region80: #{tpu_custom_call.1} parent=11 // pred_fallthru
          _
        // Predicated region
        $region81: #{tpu_custom_call.1} parent=11 // pred_check
          %p602 = pneg %p436
        $region82: #{tpu_custom_call.1} parent=11 // pred_check_branch
          %604 = sbr.rel (%p602) target = $region84
        $region83: #{tpu_custom_call.1} parent=11 // pred_region
          _
        $region84: #{tpu_custom_call.1} parent=11 // pred_fallthru
          _
        // Predicated region
        $region85: #{tpu_custom_call.1} parent=11 // pred_check
          %p605 = pneg %p457
        $region86: #{tpu_custom_call.1} parent=11 // pred_check_branch
          %607 = sbr.rel (%p605) target = $region88
        $region87: #{tpu_custom_call.1} parent=11 // pred_region
          _
        $region88: #{tpu_custom_call.1} parent=11 // pred_fallthru
          _
        // Predicated region
        $region89: #{tpu_custom_call.1} parent=11 // pred_check
          %p608 = pneg %p478
        $region90: #{tpu_custom_call.1} parent=11 // pred_check_branch
          %610 = sbr.rel (%p608) target = $region92
        $region91: #{tpu_custom_call.1} parent=11 // pred_region
          _
        $region92: #{tpu_custom_call.1} parent=11 // pred_fallthru
          _
        // Predicated region
        $region93: #{tpu_custom_call.1} parent=11 // pred_check
          %p611 = pneg %p499
        $region94: #{tpu_custom_call.1} parent=11 // pred_check_branch
          %613 = sbr.rel (%p611) target = $region96
        $region95: #{tpu_custom_call.1} parent=11 // pred_region
          _
        $region96: #{tpu_custom_call.1} parent=11 // pred_fallthru
          _
      $region12: #{tpu_custom_call.1} parent=5 // pred_fallthru
        _
      %p614 = scmp.lt.s32.totalorder %s32, 2
      // Predicated region
      $region97: #{tpu_custom_call.1} parent=5 // pred_check
        %p615 = pneg %p614
      $region98: #{tpu_custom_call.1} parent=5 // pred_check_branch
        %617 = sbr.rel (%p615) target = $region100
      $region99: #{tpu_custom_call.1} parent=5 // pred_region
        // Predicated region
        $region101: #{tpu_custom_call.1} parent=99 // pred_check
          %p618 = pneg %p52
        $region102: #{tpu_custom_call.1} parent=99 // pred_check_branch
          %620 = sbr.rel (%p618) target = $region104
        $region103: #{tpu_custom_call.1} parent=99 // pred_region
          %p621 = scmp.lt.s32.totalorder %s32, 1
          %s622 = scalar_select %p621, %s32, 1
          %s623 = smul.addr %s622, 2
          %s624 = smul.addr %s623, 4
          %s625 = scalar_lea.vmem %s0, %s624
        $region104: #{tpu_custom_call.1} parent=99 // pred_fallthru
          _
      $region100: #{tpu_custom_call.1} parent=5 // pred_fallthru
        _
      %p626 = scmp.le.s32.totalorder 1, %s32
      %p627 = scmp.lt.s32.totalorder %s32, 3
      %p628 = pnand %p626, %p627
      %p629 = pneg %p628
      // Predicated region
      $region105: #{tpu_custom_call.1} parent=5 // pred_check
        _
      $region106: #{tpu_custom_call.1} parent=5 // pred_check_branch
        %631 = sbr.rel (%p628) target = $region108
      $region107: #{tpu_custom_call.1} parent=5 // pred_region
        %s632 = ssub.s32 %s32, 1
        // Predicated region
        $region109: #{tpu_custom_call.1} parent=107 // pred_check
          %p633 = pneg %p79
        $region110: #{tpu_custom_call.1} parent=107 // pred_check_branch
          %635 = sbr.rel (%p633) target = $region112
        $region111: #{tpu_custom_call.1} parent=107 // pred_region
          %637 = dma.done [#allocation5], 512
        $region112: #{tpu_custom_call.1} parent=107 // pred_fallthru
          _
        %p638 = scmp.lt.s32.totalorder %s37, 1
        %s639 = scalar_select %p638, %s37, 1
        %s640 = smul.addr %s639, 2
        %s641 = smul.addr %s640, 4
        %s642 = scalar_lea.vmem %s0, %s641
        %p643 = pneg %p58
        %p644 = pneg %p55
        %p645 = pneg %p79
        %p646 = pneg %p76
        %p647 = pneg %p100
        %p648 = pneg %p97
        %p649 = pneg %p121
        %p650 = pneg %p118
        %p651 = pneg %p142
        %p652 = pneg %p139
        %p653 = pneg %p163
        %p654 = pneg %p160
        %p655 = pneg %p184
        %p656 = pneg %p181
        %p657 = pneg %p205
        %p658 = pneg %p202
        %p659 = pneg %p226
        %p660 = pneg %p223
        %p661 = pneg %p247
        %p662 = pneg %p244
        %p663 = pneg %p268
        %p664 = pneg %p265
        %p665 = pneg %p289
        %p666 = pneg %p286
        %p667 = pneg %p310
        %p668 = pneg %p307
        %p669 = pneg %p331
        %p670 = pneg %p328
        %p671 = pneg %p352
        %p672 = pneg %p349
        %p673 = pneg %p373
        %p674 = pneg %p370
        %p675 = pneg %p394
        %p676 = pneg %p391
        %p677 = pneg %p415
        %p678 = pneg %p412
        %p679 = pneg %p436
        %p680 = pneg %p433
        %p681 = pneg %p457
        %p682 = pneg %p454
        %p683 = pneg %p478
        %p684 = pneg %p475
        %p685 = pneg %p499
        %p686 = pneg %p496
        %p687 = pneg %p525
        %p688 = pneg %p522
        %s689 = sand.u32 %s512, 1
        %s690 = scalar_lea.sflag [#allocation6], %s689
        %s691 = sand.u32 %s512, 1
        %s692 = smul.addr %s691, 16
        %s693 = scalar_lea.vmem [#allocation7], %s692
        %p694 = scmp.lt.s32.totalorder %s37, 1
        %s695 = scalar_select %p694, %s37, 1
        %s696 = smul.addr %s695, 2
        %s697 = smul.addr %s696, 4
        %s698 = scalar_lea.vmem %s0, %s697
        %699 = vst [vmem:[#allocation2] sm:$0xff] 0.0
        %700 = vst [vmem:[#allocation2 + $0x8] sm:$0xff] 0.0
        %701 = vst [vmem:[#allocation2 + $0x10] sm:$0xff] 0.0
        %702 = vst [vmem:[#allocation2 + $0x18] sm:$0xff] 0.0
        %v703 = vld [vmem:[%s698] sm:$0xff]
        %v704 = vld [vmem:[%s2] sm:$0xff]
        %v705 = vld [vmem:[%s3] sm:$0xff]
        %v706 = vld [vmem:[%s4] sm:$0xff]
        %v707 = vld [vmem:[%s5] sm:$0xff]
        %v708 = vld [vmem:[%s6] sm:$0xff]
        %v709 = vld [vmem:[%s7] sm:$0xff]
        %v710 = vld [vmem:[%s8] sm:$0xff]
        %v711 = vld [vmem:[%s9] sm:$0xff]
        %713 = vset.pattern.permute.xlu0 0
        %714 = vperm.xlu0 %713, %v711
        %v715 = vpop.permute.xlu0 %714
        %718 = vst [vmem:[#allocation1] ss:$2 sm:$0xff] %v703
        %v719 = vld.sshfl [vmem:[#allocation1] sm:$0xff pattern:$0x75316420]
        %v720 = vld.sshfl [vmem:[#allocation1 + $0x8] sm:$0xff pattern:$0x75316420]
        %vm721 = vcmask 31744
        %v723 = vsel %vm721, %v710, 0
        %vm725 = vcmask 1043456
        %v726 = vsel %vm725, %v719, 0
        %v728 = vsel %vm725, %v720, 0
        %730 = vmatpush.msra.mxu0 0.0
        %731 = vmatpush.msra.mxu0 0.0
        %732 = vmatpush.msra.mxu0 0.0
        %733 = vmatpush.msra.mxu0 0.0
        %734 = vmatpush.msra.mxu0 0.0
        %735 = vmatpush.msra.mxu0 0.0
        %736 = vmatpush.msra.mxu0 0.0
        %737 = vmatpush.msra.mxu0 0.0
        %738 = vmatpush.msra.mxu0 0.0
        %739 = vmatpush.msra.mxu0 0.0
        %740 = vmatpush.msra.mxu0 0.0
        %741 = vmatpush.msra.mxu0 0.0
        %742 = vmatpush.msra.mxu0 0.0
        %743 = vmatpush.msra.mxu0 0.0
        %744 = vmatpush.msra.mxu0 0.0
        %745 = vmatpush.msra.mxu0 %v726
        %746 = vmatmul.f32.gmra.mxu0 %v723
        %v747 = vpop.f32.mrf.mxu0
        %v748 = vadd.f32 %v715, %v747
        %749 = vdwg.mxu0
        %750 = vmatpush.msra.mxu0 0.0
        %751 = vmatpush.msra.mxu0 0.0
        %752 = vmatpush.msra.mxu0 0.0
        %753 = vmatpush.msra.mxu0 0.0
        %754 = vmatpush.msra.mxu0 0.0
        %755 = vmatpush.msra.mxu0 0.0
        %756 = vmatpush.msra.mxu0 0.0
        %757 = vmatpush.msra.mxu0 0.0
        %758 = vmatpush.msra.mxu0 0.0
        %759 = vmatpush.msra.mxu0 0.0
        %760 = vmatpush.msra.mxu0 0.0
        %761 = vmatpush.msra.mxu0 0.0
        %762 = vmatpush.msra.mxu0 0.0
        %763 = vmatpush.msra.mxu0 0.0
        %764 = vmatpush.msra.mxu0 0.0
        %765 = vmatpush.msra.mxu0 %v728
        %766 = vmatmul.f32.gmra.mxu0 %v723
        %v767 = vpop.f32.mrf.mxu0
        %v768 = vadd.f32 %v715, %v767
        %769 = vdwg.mxu0
        %771 = vset.pattern.permute.xlu0 0
        %772 = vperm.xlu0 %771, %v705
        %v773 = vpop.permute.xlu0 %772
        %775 = vst [vmem:[#allocation1] ss:$2 sm:$0xff] %v703
        %v776 = vld.sshfl [vmem:[#allocation1] sm:$0xff pattern:$0x75316420]
        %v777 = vld.sshfl [vmem:[#allocation1 + $0x8] sm:$0xff pattern:$0x75316420]
        %v779 = vsel %vm721, %v704, 0
        %v781 = vsel %vm725, %v776, 0
        %v783 = vsel %vm725, %v777, 0
        %785 = vmatpush.msra.mxu0 0.0
        %786 = vmatpush.msra.mxu0 0.0
        %787 = vmatpush.msra.mxu0 0.0
        %788 = vmatpush.msra.mxu0 0.0
        %789 = vmatpush.msra.mxu0 0.0
        %790 = vmatpush.msra.mxu0 0.0
        %791 = vmatpush.msra.mxu0 0.0
        %792 = vmatpush.msra.mxu0 0.0
        %793 = vmatpush.msra.mxu0 0.0
        %794 = vmatpush.msra.mxu0 0.0
        %795 = vmatpush.msra.mxu0 0.0
        %796 = vmatpush.msra.mxu0 0.0
        %797 = vmatpush.msra.mxu0 0.0
        %798 = vmatpush.msra.mxu0 0.0
        %799 = vmatpush.msra.mxu0 0.0
        %800 = vmatpush.msra.mxu0 %v781
        %801 = vmatmul.f32.gmra.mxu0 %v779
        %v802 = vpop.f32.mrf.mxu0
        %v803 = vadd.f32 %v773, %v802
        %804 = vdwg.mxu0
        %805 = vmatpush.msra.mxu0 0.0
        %806 = vmatpush.msra.mxu0 0.0
        %807 = vmatpush.msra.mxu0 0.0
        %808 = vmatpush.msra.mxu0 0.0
        %809 = vmatpush.msra.mxu0 0.0
        %810 = vmatpush.msra.mxu0 0.0
        %811 = vmatpush.msra.mxu0 0.0
        %812 = vmatpush.msra.mxu0 0.0
        %813 = vmatpush.msra.mxu0 0.0
        %814 = vmatpush.msra.mxu0 0.0
        %815 = vmatpush.msra.mxu0 0.0
        %816 = vmatpush.msra.mxu0 0.0
        %817 = vmatpush.msra.mxu0 0.0
        %818 = vmatpush.msra.mxu0 0.0
        %819 = vmatpush.msra.mxu0 0.0
        %820 = vmatpush.msra.mxu0 %v783
        %821 = vmatmul.f32.gmra.mxu0 %v779
        %v822 = vpop.f32.mrf.mxu0
        %v823 = vadd.f32 %v773, %v822
        %824 = vdwg.mxu0
        %v825 = vmax.f32 %v803, 0.0
        %v826 = vmax.f32 %v823, 0.0
        %827 = vst [vmem:[#allocation2 + $0x8] sm:$0xff] %v825
        %828 = vst [vmem:[#allocation2 + $0x10] sm:$0xff] %v826
        %v829 = vld [vmem:[#allocation2] sm:$0xff]
        %v830 = vld [vmem:[#allocation2 + $0x8] sm:$0xff]
        %v831 = vld [vmem:[#allocation2 + $0x10] sm:$0xff]
        %v832 = vld [vmem:[#allocation4] ss:$8 sm:$0x3]
        %v834 = vperm.slane %v832, 0
        %v835 = vperm.slane %v832, 1
        %836 = vrot.lane.b32.xlu0 %v834, 111
        %v837 = vpop.permute.xlu0 %836
        %838 = vrot.lane.b32.xlu0 %v835, 111
        %v839 = vpop.permute.xlu0 %838
        %vm840 = vcmask 908288
        %v841 = vsel %vm840, %v837, %v839
        %v845 = vmul.f32 %v829, %v837
        %v846 = vmul.f32 %v830, %v841
        %v847 = vmul.f32 %v831, %v839
        %851 = vrot.lane.b32.xlu0 %v845, 17
        %v852 = vpop.permute.xlu0 %851
        %853 = vrot.lane.b32.xlu0 %v846, 17
        %v854 = vpop.permute.xlu0 %853
        %855 = vrot.lane.b32.xlu0 %v847, 17
        %v856 = vpop.permute.xlu0 %855
        %vm857 = vcmask 138240
        %v858 = vsel %vm857, %v852, %v854
        %v859 = vsel %vm857, %v854, %v856
        %862 = vst [vmem:[#allocation3] sm:$0xff] %v858
        %863 = vst [vmem:[#allocation3 + $0x8] sm:$0xff] %v859
        %v864 = vld [vmem:[#allocation2] sm:$0xff]
        %v865 = vld [vmem:[#allocation2 + $0x8] sm:$0xff]
        %v866 = vld [vmem:[#allocation2 + $0x10] sm:$0xff]
        %s867 = scalar_lea.vmem [#allocation4], 1
        %v868 = vld [vmem:[%s867] ss:$8 sm:$0x3]
        %v870 = vperm.slane %v868, 0
        %v871 = vperm.slane %v868, 1
        %872 = vrot.lane.b32.xlu0 %v870, 112
        %v873 = vpop.permute.xlu0 %872
        %874 = vrot.lane.b32.xlu0 %v871, 112
        %v875 = vpop.permute.xlu0 %874
        %vm876 = vcmask 916480
        %v877 = vsel %vm876, %v873, %v875
        %v881 = vmul.f32 %v864, %v873
        %v882 = vmul.f32 %v865, %v877
        %v883 = vmul.f32 %v866, %v875
        %887 = vrot.lane.b32.xlu0 %v881, 16
        %v888 = vpop.permute.xlu0 %887
        %889 = vrot.lane.b32.xlu0 %v882, 16
        %v890 = vpop.permute.xlu0 %889
        %891 = vrot.lane.b32.xlu0 %v883, 16
        %v892 = vpop.permute.xlu0 %891
        %vm893 = vcmask 130048
        %v894 = vsel %vm893, %v888, %v890
        %v895 = vsel %vm893, %v890, %v892
        %898 = vst [vmem:[#allocation3 + $0x10] sm:$0xff] %v894
        %899 = vst [vmem:[#allocation3 + $0x18] sm:$0xff] %v895
        %v900 = vld [vmem:[#allocation2] sm:$0xff]
        %v901 = vld [vmem:[#allocation2 + $0x8] sm:$0xff]
        %v902 = vld [vmem:[#allocation2 + $0x10] sm:$0xff]
        %s903 = scalar_lea.vmem [#allocation4], 2
        %v904 = vld [vmem:[%s903] ss:$8 sm:$0x3]
        %v906 = vperm.slane %v904, 0
        %v907 = vperm.slane %v904, 1
        %908 = vrot.lane.b32.xlu0 %v906, 113
        %v909 = vpop.permute.xlu0 %908
        %910 = vrot.lane.b32.xlu0 %v907, 113
        %v911 = vpop.permute.xlu0 %910
        %vm912 = vcmask 924672
        %v913 = vsel %vm912, %v909, %v911
        %v917 = vmul.f32 %v900, %v909
        %v918 = vmul.f32 %v901, %v913
        %v919 = vmul.f32 %v902, %v911
        %923 = vrot.lane.b32.xlu0 %v917, 15
        %v924 = vpop.permute.xlu0 %923
        %925 = vrot.lane.b32.xlu0 %v918, 15
        %v926 = vpop.permute.xlu0 %925
        %927 = vrot.lane.b32.xlu0 %v919, 15
        %v928 = vpop.permute.xlu0 %927
        %vm929 = vcmask 121856
        %v930 = vsel %vm929, %v924, %v926
        %v931 = vsel %vm929, %v926, %v928
        %934 = vst [vmem:[#allocation3 + $0x20] sm:$0xff] %v930
        %935 = vst [vmem:[#allocation3 + $0x28] sm:$0xff] %v931
        %v936 = vld [vmem:[#allocation2] sm:$0xff]
        %v937 = vld [vmem:[#allocation2 + $0x8] sm:$0xff]
        %v938 = vld [vmem:[#allocation2 + $0x10] sm:$0xff]
        %s939 = scalar_lea.vmem [#allocation4], 3
        %v940 = vld [vmem:[%s939] ss:$8 sm:$0x3]
        %v942 = vperm.slane %v940, 0
        %v943 = vperm.slane %v940, 1
        %944 = vrot.lane.b32.xlu0 %v942, 127
        %v945 = vpop.permute.xlu0 %944
        %946 = vrot.lane.b32.xlu0 %v943, 127
        %v947 = vpop.permute.xlu0 %946
        %vm948 = vcmask 1039360
        %v949 = vsel %vm948, %v945, %v947
        %v953 = vmul.f32 %v936, %v945
        %v954 = vmul.f32 %v937, %v949
        %v955 = vmul.f32 %v938, %v947
        %959 = vrot.lane.b32.xlu0 %v953, 1
        %v960 = vpop.permute.xlu0 %959
        %961 = vrot.lane.b32.xlu0 %v954, 1
        %v962 = vpop.permute.xlu0 %961
        %963 = vrot.lane.b32.xlu0 %v955, 1
        %v964 = vpop.permute.xlu0 %963
        %vm965 = vcmask 7168
        %v966 = vsel %vm965, %v960, %v962
        %v967 = vsel %vm965, %v962, %v964
        %970 = vst [vmem:[#allocation3 + $0x30] sm:$0xff] %v966
        %971 = vst [vmem:[#allocation3 + $0x38] sm:$0xff] %v967
        %v972 = vld [vmem:[#allocation2 + $0x8] sm:$0xff]
        %v973 = vld [vmem:[#allocation2 + $0x10] sm:$0xff]
        %s974 = scalar_lea.vmem [#allocation4], 4
        %v975 = vld [vmem:[%s974] ss:$8 sm:$0x3]
        %v977 = vperm.slane %v975, 0
        %v978 = vperm.slane %v975, 1
        %v981 = vmul.f32 %v972, %v977
        %v982 = vmul.f32 %v973, %v978
        %983 = vst [vmem:[#allocation3 + $0x40] sm:$0xff] %v981
        %984 = vst [vmem:[#allocation3 + $0x48] sm:$0xff] %v982
        %v985 = vld [vmem:[#allocation2 + $0x8] sm:$0xff]
        %v986 = vld [vmem:[#allocation2 + $0x10] sm:$0xff]
        %v987 = vld [vmem:[#allocation2 + $0x18] sm:$0xff]
        %s988 = scalar_lea.vmem [#allocation4], 5
        %v989 = vld [vmem:[%s988] ss:$8 sm:$0x3]
        %v991 = vperm.slane %v989, 0
        %v992 = vperm.slane %v989, 1
        %993 = vrot.lane.b32.xlu0 %v991, 1
        %v994 = vpop.permute.xlu0 %993
        %995 = vrot.lane.b32.xlu0 %v992, 1
        %v996 = vpop.permute.xlu0 %995
        %v997 = vsel %vm965, %v994, %v996
        %v1001 = vmul.f32 %v985, %v994
        %v1002 = vmul.f32 %v986, %v997
        %v1003 = vmul.f32 %v987, %v996
        %1007 = vrot.lane.b32.xlu0 %v1001, 127
        %v1008 = vpop.permute.xlu0 %1007
        %1009 = vrot.lane.b32.xlu0 %v1002, 127
        %v1010 = vpop.permute.xlu0 %1009
        %1011 = vrot.lane.b32.xlu0 %v1003, 127
        %v1012 = vpop.permute.xlu0 %1011
        %v1013 = vsel %vm948, %v1008, %v1010
        %v1014 = vsel %vm948, %v1010, %v1012
        %1017 = vst [vmem:[#allocation3 + $0x50] sm:$0xff] %v1013
        %1018 = vst [vmem:[#allocation3 + $0x58] sm:$0xff] %v1014
        %v1019 = vld [vmem:[#allocation2 + $0x8] sm:$0xff]
        %v1020 = vld [vmem:[#allocation2 + $0x10] sm:$0xff]
        %v1021 = vld [vmem:[#allocation2 + $0x18] sm:$0xff]
        %s1022 = scalar_lea.vmem [#allocation4], 6
        %v1023 = vld [vmem:[%s1022] ss:$8 sm:$0x3]
        %v1025 = vperm.slane %v1023, 0
        %v1026 = vperm.slane %v1023, 1
        %1027 = vrot.lane.b32.xlu0 %v1025, 15
        %v1028 = vpop.permute.xlu0 %1027
        %1029 = vrot.lane.b32.xlu0 %v1026, 15
        %v1030 = vpop.permute.xlu0 %1029
        %v1031 = vsel %vm929, %v1028, %v1030
        %v1035 = vmul.f32 %v1019, %v1028
        %v1036 = vmul.f32 %v1020, %v1031
        %v1037 = vmul.f32 %v1021, %v1030
        %1041 = vrot.lane.b32.xlu0 %v1035, 113
        %v1042 = vpop.permute.xlu0 %1041
        %1043 = vrot.lane.b32.xlu0 %v1036, 113
        %v1044 = vpop.permute.xlu0 %1043
        %1045 = vrot.lane.b32.xlu0 %v1037, 113
        %v1046 = vpop.permute.xlu0 %1045
        %v1047 = vsel %vm912, %v1042, %v1044
        %v1048 = vsel %vm912, %v1044, %v1046
        %1051 = vst [vmem:[#allocation3 + $0x60] sm:$0xff] %v1047
        %1052 = vst [vmem:[#allocation3 + $0x68] sm:$0xff] %v1048
        %v1053 = vld [vmem:[#allocation2 + $0x8] sm:$0xff]
        %v1054 = vld [vmem:[#allocation2 + $0x10] sm:$0xff]
        %v1055 = vld [vmem:[#allocation2 + $0x18] sm:$0xff]
        %s1056 = scalar_lea.vmem [#allocation4], 7
        %v1057 = vld [vmem:[%s1056] ss:$8 sm:$0x3]
        %v1059 = vperm.slane %v1057, 0
        %v1060 = vperm.slane %v1057, 1
        %1061 = vrot.lane.b32.xlu0 %v1059, 16
        %v1062 = vpop.permute.xlu0 %1061
        %1063 = vrot.lane.b32.xlu0 %v1060, 16
        %v1064 = vpop.permute.xlu0 %1063
        %v1065 = vsel %vm893, %v1062, %v1064
        %v1069 = vmul.f32 %v1053, %v1062
        %v1070 = vmul.f32 %v1054, %v1065
        %v1071 = vmul.f32 %v1055, %v1064
        %1075 = vrot.lane.b32.xlu0 %v1069, 112
        %v1076 = vpop.permute.xlu0 %1075
        %1077 = vrot.lane.b32.xlu0 %v1070, 112
        %v1078 = vpop.permute.xlu0 %1077
        %1079 = vrot.lane.b32.xlu0 %v1071, 112
        %v1080 = vpop.permute.xlu0 %1079
        %v1081 = vsel %vm876, %v1076, %v1078
        %v1082 = vsel %vm876, %v1078, %v1080
        %1085 = vst [vmem:[#allocation3 + $0x70] sm:$0xff] %v1081
        %1086 = vst [vmem:[#allocation3 + $0x78] sm:$0xff] %v1082
        %v1087 = vld [vmem:[#allocation2 + $0x8] sm:$0xff]
        %v1088 = vld [vmem:[#allocation2 + $0x10] sm:$0xff]
        %v1089 = vld [vmem:[#allocation2 + $0x18] sm:$0xff]
        %s1090 = scalar_lea.vmem [#allocation4], 16
        %v1091 = vld [vmem:[%s1090] ss:$8 sm:$0x3]
        %v1093 = vperm.slane %v1091, 0
        %v1094 = vperm.slane %v1091, 1
        %1095 = vrot.lane.b32.xlu0 %v1093, 17
        %v1096 = vpop.permute.xlu0 %1095
        %1097 = vrot.lane.b32.xlu0 %v1094, 17
        %v1098 = vpop.permute.xlu0 %1097
        %v1099 = vsel %vm857, %v1096, %v1098
        %v1103 = vmul.f32 %v1087, %v1096
        %v1104 = vmul.f32 %v1088, %v1099
        %v1105 = vmul.f32 %v1089, %v1098
        %1109 = vrot.lane.b32.xlu0 %v1103, 111
        %v1110 = vpop.permute.xlu0 %1109
        %1111 = vrot.lane.b32.xlu0 %v1104, 111
        %v1112 = vpop.permute.xlu0 %1111
        %1113 = vrot.lane.b32.xlu0 %v1105, 111
        %v1114 = vpop.permute.xlu0 %1113
        %v1115 = vsel %vm840, %v1110, %v1112
        %v1116 = vsel %vm840, %v1112, %v1114
        %1119 = vst [vmem:[#allocation3 + $0x80] sm:$0xff] %v1115
        %1120 = vst [vmem:[#allocation3 + $0x88] sm:$0xff] %v1116
        %v1121 = vld [vmem:[#allocation3] sm:$0xff]
        %v1122 = vld [vmem:[#allocation3 + $0x8] sm:$0xff]
        %v1123 = vld [vmem:[#allocation3 + $0x10] sm:$0xff]
        %v1124 = vld [vmem:[#allocation3 + $0x18] sm:$0xff]
        %v1125 = vld [vmem:[#allocation3 + $0x20] sm:$0xff]
        %v1126 = vld [vmem:[#allocation3 + $0x28] sm:$0xff]
        %v1127 = vld [vmem:[#allocation3 + $0x30] sm:$0xff]
        %v1128 = vld [vmem:[#allocation3 + $0x38] sm:$0xff]
        %v1129 = vld [vmem:[#allocation3 + $0x40] sm:$0xff]
        %v1130 = vld [vmem:[#allocation3 + $0x48] sm:$0xff]
        %v1131 = vld [vmem:[#allocation3 + $0x50] sm:$0xff]
        %v1132 = vld [vmem:[#allocation3 + $0x58] sm:$0xff]
        %v1133 = vld [vmem:[#allocation3 + $0x60] sm:$0xff]
        %v1134 = vld [vmem:[#allocation3 + $0x68] sm:$0xff]
        %v1135 = vld [vmem:[#allocation3 + $0x70] sm:$0xff]
        %v1136 = vld [vmem:[#allocation3 + $0x78] sm:$0xff]
        %v1137 = vld [vmem:[#allocation3 + $0x80] sm:$0xff]
        %v1138 = vld [vmem:[#allocation3 + $0x88] sm:$0xff]
        %1140 = vset.pattern.permute.xlu0 0
        %1141 = vperm.xlu0 %1140, %v707
        %v1142 = vpop.permute.xlu0 %1141
        %vm1144 = vcmask 588800
        %v1146 = vsel %vm1144, %v706, 0
        %1148 = vmatpush.msra.mxu0 0.0
        %1149 = vmatpush.msra.mxu0 0.0
        %1150 = vmatpush.msra.mxu0 0.0
        %1151 = vmatpush.msra.mxu0 0.0
        %1152 = vmatpush.msra.mxu0 0.0
        %1153 = vmatpush.msra.mxu0 0.0
        %1154 = vmatpush.msra.mxu0 0.0
        %1155 = vmatpush.msra.mxu0 %v1137
        %1156 = vmatpush.msra.mxu0 %v1135
        %1157 = vmatpush.msra.mxu0 %v1133
        %1158 = vmatpush.msra.mxu0 %v1131
        %1159 = vmatpush.msra.mxu0 %v1129
        %1160 = vmatpush.msra.mxu0 %v1127
        %1161 = vmatpush.msra.mxu0 %v1125
        %1162 = vmatpush.msra.mxu0 %v1123
        %1163 = vmatpush.msra.mxu0 %v1121
        %1164 = vmatmul.f32.gmra.mxu0 %v1146
        %v1165 = vpop.f32.mrf.mxu0
        %v1166 = vadd.f32 %v1142, %v1165
        %1167 = vdwg.mxu0
        %1168 = vmatpush.msra.mxu0 0.0
        %1169 = vmatpush.msra.mxu0 0.0
        %1170 = vmatpush.msra.mxu0 0.0
        %1171 = vmatpush.msra.mxu0 0.0
        %1172 = vmatpush.msra.mxu0 0.0
        %1173 = vmatpush.msra.mxu0 0.0
        %1174 = vmatpush.msra.mxu0 0.0
        %1175 = vmatpush.msra.mxu0 %v1138
        %1176 = vmatpush.msra.mxu0 %v1136
        %1177 = vmatpush.msra.mxu0 %v1134
        %1178 = vmatpush.msra.mxu0 %v1132
        %1179 = vmatpush.msra.mxu0 %v1130
        %1180 = vmatpush.msra.mxu0 %v1128
        %1181 = vmatpush.msra.mxu0 %v1126
        %1182 = vmatpush.msra.mxu0 %v1124
        %1183 = vmatpush.msra.mxu0 %v1122
        %1184 = vmatmul.f32.gmra.mxu0 %v1146
        %v1185 = vpop.f32.mrf.mxu0
        %v1186 = vadd.f32 %v1142, %v1185
        %1187 = vdwg.mxu0
        %v1188 = vmax.f32 %v1166, 0.0
        %v1189 = vmax.f32 %v1186, 0.0
        %1191 = vset.pattern.permute.xlu0 0
        %1192 = vperm.xlu0 %1191, %v709
        %v1193 = vpop.permute.xlu0 %1192
        %vm1195 = vcmask 64512
        %v1197 = vsel %vm1195, %v708, 0
        %1199 = vmatpush.msra.mxu0 0.0
        %1200 = vmatpush.msra.mxu0 0.0
        %1201 = vmatpush.msra.mxu0 0.0
        %1202 = vmatpush.msra.mxu0 0.0
        %1203 = vmatpush.msra.mxu0 0.0
        %1204 = vmatpush.msra.mxu0 0.0
        %1205 = vmatpush.msra.mxu0 0.0
        %1206 = vmatpush.msra.mxu0 0.0
        %1207 = vmatpush.msra.mxu0 0.0
        %1208 = vmatpush.msra.mxu0 0.0
        %1209 = vmatpush.msra.mxu0 0.0
        %1210 = vmatpush.msra.mxu0 0.0
        %1211 = vmatpush.msra.mxu0 0.0
        %1212 = vmatpush.msra.mxu0 0.0
        %1213 = vmatpush.msra.mxu0 0.0
        %1214 = vmatpush.msra.mxu0 %v1188
        %1215 = vmatmul.f32.gmra.mxu0 %v1197
        %v1216 = vpop.f32.mrf.mxu0
        %v1217 = vadd.f32 %v1193, %v1216
        %1218 = vdwg.mxu0
        %1219 = vmatpush.msra.mxu0 0.0
        %1220 = vmatpush.msra.mxu0 0.0
        %1221 = vmatpush.msra.mxu0 0.0
        %1222 = vmatpush.msra.mxu0 0.0
        %1223 = vmatpush.msra.mxu0 0.0
        %1224 = vmatpush.msra.mxu0 0.0
        %1225 = vmatpush.msra.mxu0 0.0
        %1226 = vmatpush.msra.mxu0 0.0
        %1227 = vmatpush.msra.mxu0 0.0
        %1228 = vmatpush.msra.mxu0 0.0
        %1229 = vmatpush.msra.mxu0 0.0
        %1230 = vmatpush.msra.mxu0 0.0
        %1231 = vmatpush.msra.mxu0 0.0
        %1232 = vmatpush.msra.mxu0 0.0
        %1233 = vmatpush.msra.mxu0 0.0
        %1234 = vmatpush.msra.mxu0 %v1189
        %1235 = vmatmul.f32.gmra.mxu0 %v1197
        %v1236 = vpop.f32.mrf.mxu0
        %v1237 = vadd.f32 %v1193, %v1236
        %1238 = vdwg.mxu0
        %v1239 = vadd.f32 %v748, %v1217
        %v1240 = vadd.f32 %v768, %v1237
        %v1241 = vld [vmem:[%s10] sm:$0xff]
        %v1242 = vld [vmem:[%s11] sm:$0xff]
        %v1243 = vld [vmem:[%s12] sm:$0xff]
        %v1244 = vld [vmem:[%s13] sm:$0xff]
        %v1245 = vld [vmem:[%s14] sm:$0xff]
        %v1246 = vld [vmem:[%s15] sm:$0xff]
        %1248 = vset.pattern.permute.xlu0 0
        %1249 = vperm.xlu0 %1248, %v1242
        %v1250 = vpop.permute.xlu0 %1249
        %v1253 = vsel %vm1195, %v1241, 0
        %1255 = vmatpush.msra.mxu0 0.0
        %1256 = vmatpush.msra.mxu0 0.0
        %1257 = vmatpush.msra.mxu0 0.0
        %1258 = vmatpush.msra.mxu0 0.0
        %1259 = vmatpush.msra.mxu0 0.0
        %1260 = vmatpush.msra.mxu0 0.0
        %1261 = vmatpush.msra.mxu0 0.0
        %1262 = vmatpush.msra.mxu0 0.0
        %1263 = vmatpush.msra.mxu0 0.0
        %1264 = vmatpush.msra.mxu0 0.0
        %1265 = vmatpush.msra.mxu0 0.0
        %1266 = vmatpush.msra.mxu0 0.0
        %1267 = vmatpush.msra.mxu0 0.0
        %1268 = vmatpush.msra.mxu0 0.0
        %1269 = vmatpush.msra.mxu0 0.0
        %1270 = vmatpush.msra.mxu0 %v1239
        %1271 = vmatmul.f32.gmra.mxu0 %v1253
        %v1272 = vpop.f32.mrf.mxu0
        %v1273 = vadd.f32 %v1250, %v1272
        %1274 = vdwg.mxu0
        %1275 = vmatpush.msra.mxu0 0.0
        %1276 = vmatpush.msra.mxu0 0.0
        %1277 = vmatpush.msra.mxu0 0.0
        %1278 = vmatpush.msra.mxu0 0.0
        %1279 = vmatpush.msra.mxu0 0.0
        %1280 = vmatpush.msra.mxu0 0.0
        %1281 = vmatpush.msra.mxu0 0.0
        %1282 = vmatpush.msra.mxu0 0.0
        %1283 = vmatpush.msra.mxu0 0.0
        %1284 = vmatpush.msra.mxu0 0.0
        %1285 = vmatpush.msra.mxu0 0.0
        %1286 = vmatpush.msra.mxu0 0.0
        %1287 = vmatpush.msra.mxu0 0.0
        %1288 = vmatpush.msra.mxu0 0.0
        %1289 = vmatpush.msra.mxu0 0.0
        %1290 = vmatpush.msra.mxu0 %v1240
        %1291 = vmatmul.f32.gmra.mxu0 %v1253
        %v1292 = vpop.f32.mrf.mxu0
        %v1293 = vadd.f32 %v1250, %v1292
        %1294 = vdwg.mxu0
        %v1295 = vmax.f32 %v1273, 0.0
        %v1296 = vmax.f32 %v1293, 0.0
        %1297 = vst [vmem:[#allocation2 + $0x8] sm:$0xff] %v1295
        %1298 = vst [vmem:[#allocation2 + $0x10] sm:$0xff] %v1296
        %v1299 = vld [vmem:[#allocation2] sm:$0xff]
        %v1300 = vld [vmem:[#allocation2 + $0x8] sm:$0xff]
        %v1301 = vld [vmem:[#allocation2 + $0x10] sm:$0xff]
        %v1302 = vld [vmem:[#allocation4] ss:$8 sm:$0x3]
        %v1304 = vperm.slane %v1302, 0
        %v1305 = vperm.slane %v1302, 1
        %1306 = vrot.lane.b32.xlu0 %v1304, 111
        %v1307 = vpop.permute.xlu0 %1306
        %1308 = vrot.lane.b32.xlu0 %v1305, 111
        %v1309 = vpop.permute.xlu0 %1308
        %v1310 = vsel %vm840, %v1307, %v1309
        %v1314 = vmul.f32 %v1299, %v1307
        %v1315 = vmul.f32 %v1300, %v1310
        %v1316 = vmul.f32 %v1301, %v1309
        %1320 = vrot.lane.b32.xlu0 %v1314, 17
        %v1321 = vpop.permute.xlu0 %1320
        %1322 = vrot.lane.b32.xlu0 %v1315, 17
        %v1323 = vpop.permute.xlu0 %1322
        %1324 = vrot.lane.b32.xlu0 %v1316, 17
        %v1325 = vpop.permute.xlu0 %1324
        %v1326 = vsel %vm857, %v1321, %v1323
        %v1327 = vsel %vm857, %v1323, %v1325
        %1330 = vst [vmem:[#allocation3] sm:$0xff] %v1326
        %1331 = vst [vmem:[#allocation3 + $0x8] sm:$0xff] %v1327
        %v1332 = vld [vmem:[#allocation2] sm:$0xff]
        %v1333 = vld [vmem:[#allocation2 + $0x8] sm:$0xff]
        %v1334 = vld [vmem:[#allocation2 + $0x10] sm:$0xff]
        %v1335 = vld [vmem:[%s867] ss:$8 sm:$0x3]
        %v1337 = vperm.slane %v1335, 0
        %v1338 = vperm.slane %v1335, 1
        %1339 = vrot.lane.b32.xlu0 %v1337, 112
        %v1340 = vpop.permute.xlu0 %1339
        %1341 = vrot.lane.b32.xlu0 %v1338, 112
        %v1342 = vpop.permute.xlu0 %1341
        %v1343 = vsel %vm876, %v1340, %v1342
        %v1347 = vmul.f32 %v1332, %v1340
        %v1348 = vmul.f32 %v1333, %v1343
        %v1349 = vmul.f32 %v1334, %v1342
        %1353 = vrot.lane.b32.xlu0 %v1347, 16
        %v1354 = vpop.permute.xlu0 %1353
        %1355 = vrot.lane.b32.xlu0 %v1348, 16
        %v1356 = vpop.permute.xlu0 %1355
        %1357 = vrot.lane.b32.xlu0 %v1349, 16
        %v1358 = vpop.permute.xlu0 %1357
        %v1359 = vsel %vm893, %v1354, %v1356
        %v1360 = vsel %vm893, %v1356, %v1358
        %1363 = vst [vmem:[#allocation3 + $0x10] sm:$0xff] %v1359
        %1364 = vst [vmem:[#allocation3 + $0x18] sm:$0xff] %v1360
        %v1365 = vld [vmem:[#allocation2] sm:$0xff]
        %v1366 = vld [vmem:[#allocation2 + $0x8] sm:$0xff]
        %v1367 = vld [vmem:[#allocation2 + $0x10] sm:$0xff]
        %v1368 = vld [vmem:[%s903] ss:$8 sm:$0x3]
        %v1370 = vperm.slane %v1368, 0
        %v1371 = vperm.slane %v1368, 1
        %1372 = vrot.lane.b32.xlu0 %v1370, 113
        %v1373 = vpop.permute.xlu0 %1372
        %1374 = vrot.lane.b32.xlu0 %v1371, 113
        %v1375 = vpop.permute.xlu0 %1374
        %v1376 = vsel %vm912, %v1373, %v1375
        %v1380 = vmul.f32 %v1365, %v1373
        %v1381 = vmul.f32 %v1366, %v1376
        %v1382 = vmul.f32 %v1367, %v1375
        %1386 = vrot.lane.b32.xlu0 %v1380, 15
        %v1387 = vpop.permute.xlu0 %1386
        %1388 = vrot.lane.b32.xlu0 %v1381, 15
        %v1389 = vpop.permute.xlu0 %1388
        %1390 = vrot.lane.b32.xlu0 %v1382, 15
        %v1391 = vpop.permute.xlu0 %1390
        %v1392 = vsel %vm929, %v1387, %v1389
        %v1393 = vsel %vm929, %v1389, %v1391
        %1396 = vst [vmem:[#allocation3 + $0x20] sm:$0xff] %v1392
        %1397 = vst [vmem:[#allocation3 + $0x28] sm:$0xff] %v1393
        %v1398 = vld [vmem:[#allocation2] sm:$0xff]
        %v1399 = vld [vmem:[#allocation2 + $0x8] sm:$0xff]
        %v1400 = vld [vmem:[#allocation2 + $0x10] sm:$0xff]
        %v1401 = vld [vmem:[%s939] ss:$8 sm:$0x3]
        %v1403 = vperm.slane %v1401, 0
        %v1404 = vperm.slane %v1401, 1
        %1405 = vrot.lane.b32.xlu0 %v1403, 127
        %v1406 = vpop.permute.xlu0 %1405
        %1407 = vrot.lane.b32.xlu0 %v1404, 127
        %v1408 = vpop.permute.xlu0 %1407
        %v1409 = vsel %vm948, %v1406, %v1408
        %v1413 = vmul.f32 %v1398, %v1406
        %v1414 = vmul.f32 %v1399, %v1409
        %v1415 = vmul.f32 %v1400, %v1408
        %1419 = vrot.lane.b32.xlu0 %v1413, 1
        %v1420 = vpop.permute.xlu0 %1419
        %1421 = vrot.lane.b32.xlu0 %v1414, 1
        %v1422 = vpop.permute.xlu0 %1421
        %1423 = vrot.lane.b32.xlu0 %v1415, 1
        %v1424 = vpop.permute.xlu0 %1423
        %v1425 = vsel %vm965, %v1420, %v1422
        %v1426 = vsel %vm965, %v1422, %v1424
        %1429 = vst [vmem:[#allocation3 + $0x30] sm:$0xff] %v1425
        %1430 = vst [vmem:[#allocation3 + $0x38] sm:$0xff] %v1426
        %v1431 = vld [vmem:[#allocation2 + $0x8] sm:$0xff]
        %v1432 = vld [vmem:[#allocation2 + $0x10] sm:$0xff]
        %v1433 = vld [vmem:[%s974] ss:$8 sm:$0x3]
        %v1435 = vperm.slane %v1433, 0
        %v1436 = vperm.slane %v1433, 1
        %v1439 = vmul.f32 %v1431, %v1435
        %v1440 = vmul.f32 %v1432, %v1436
        %1441 = vst [vmem:[#allocation3 + $0x40] sm:$0xff] %v1439
        %1442 = vst [vmem:[#allocation3 + $0x48] sm:$0xff] %v1440
        %v1443 = vld [vmem:[#allocation2 + $0x8] sm:$0xff]
        %v1444 = vld [vmem:[#allocation2 + $0x10] sm:$0xff]
        %v1445 = vld [vmem:[#allocation2 + $0x18] sm:$0xff]
        %v1446 = vld [vmem:[%s988] ss:$8 sm:$0x3]
        %v1448 = vperm.slane %v1446, 0
        %v1449 = vperm.slane %v1446, 1
        %1450 = vrot.lane.b32.xlu0 %v1448, 1
        %v1451 = vpop.permute.xlu0 %1450
        %1452 = vrot.lane.b32.xlu0 %v1449, 1
        %v1453 = vpop.permute.xlu0 %1452
        %v1454 = vsel %vm965, %v1451, %v1453
        %v1458 = vmul.f32 %v1443, %v1451
        %v1459 = vmul.f32 %v1444, %v1454
        %v1460 = vmul.f32 %v1445, %v1453
        %1464 = vrot.lane.b32.xlu0 %v1458, 127
        %v1465 = vpop.permute.xlu0 %1464
        %1466 = vrot.lane.b32.xlu0 %v1459, 127
        %v1467 = vpop.permute.xlu0 %1466
        %1468 = vrot.lane.b32.xlu0 %v1460, 127
        %v1469 = vpop.permute.xlu0 %1468
        %v1470 = vsel %vm948, %v1465, %v1467
        %v1471 = vsel %vm948, %v1467, %v1469
        %1474 = vst [vmem:[#allocation3 + $0x50] sm:$0xff] %v1470
        %1475 = vst [vmem:[#allocation3 + $0x58] sm:$0xff] %v1471
        %v1476 = vld [vmem:[#allocation2 + $0x8] sm:$0xff]
        %v1477 = vld [vmem:[#allocation2 + $0x10] sm:$0xff]
        %v1478 = vld [vmem:[#allocation2 + $0x18] sm:$0xff]
        %v1479 = vld [vmem:[%s1022] ss:$8 sm:$0x3]
        %v1481 = vperm.slane %v1479, 0
        %v1482 = vperm.slane %v1479, 1
        %1483 = vrot.lane.b32.xlu0 %v1481, 15
        %v1484 = vpop.permute.xlu0 %1483
        %1485 = vrot.lane.b32.xlu0 %v1482, 15
        %v1486 = vpop.permute.xlu0 %1485
        %v1487 = vsel %vm929, %v1484, %v1486
        %v1491 = vmul.f32 %v1476, %v1484
        %v1492 = vmul.f32 %v1477, %v1487
        %v1493 = vmul.f32 %v1478, %v1486
        %1497 = vrot.lane.b32.xlu0 %v1491, 113
        %v1498 = vpop.permute.xlu0 %1497
        %1499 = vrot.lane.b32.xlu0 %v1492, 113
        %v1500 = vpop.permute.xlu0 %1499
        %1501 = vrot.lane.b32.xlu0 %v1493, 113
        %v1502 = vpop.permute.xlu0 %1501
        %v1503 = vsel %vm912, %v1498, %v1500
        %v1504 = vsel %vm912, %v1500, %v1502
        %1507 = vst [vmem:[#allocation3 + $0x60] sm:$0xff] %v1503
        %1508 = vst [vmem:[#allocation3 + $0x68] sm:$0xff] %v1504
        %v1509 = vld [vmem:[#allocation2 + $0x8] sm:$0xff]
        %v1510 = vld [vmem:[#allocation2 + $0x10] sm:$0xff]
        %v1511 = vld [vmem:[#allocation2 + $0x18] sm:$0xff]
        %v1512 = vld [vmem:[%s1056] ss:$8 sm:$0x3]
        %v1514 = vperm.slane %v1512, 0
        %v1515 = vperm.slane %v1512, 1
        %1516 = vrot.lane.b32.xlu0 %v1514, 16
        %v1517 = vpop.permute.xlu0 %1516
        %1518 = vrot.lane.b32.xlu0 %v1515, 16
        %v1519 = vpop.permute.xlu0 %1518
        %v1520 = vsel %vm893, %v1517, %v1519
        %v1524 = vmul.f32 %v1509, %v1517
        %v1525 = vmul.f32 %v1510, %v1520
        %v1526 = vmul.f32 %v1511, %v1519
        %1530 = vrot.lane.b32.xlu0 %v1524, 112
        %v1531 = vpop.permute.xlu0 %1530
        %1532 = vrot.lane.b32.xlu0 %v1525, 112
        %v1533 = vpop.permute.xlu0 %1532
        %1534 = vrot.lane.b32.xlu0 %v1526, 112
        %v1535 = vpop.permute.xlu0 %1534
        %v1536 = vsel %vm876, %v1531, %v1533
        %v1537 = vsel %vm876, %v1533, %v1535
        %1540 = vst [vmem:[#allocation3 + $0x70] sm:$0xff] %v1536
        %1541 = vst [vmem:[#allocation3 + $0x78] sm:$0xff] %v1537
        %v1542 = vld [vmem:[#allocation2 + $0x8] sm:$0xff]
        %v1543 = vld [vmem:[#allocation2 + $0x10] sm:$0xff]
        %v1544 = vld [vmem:[#allocation2 + $0x18] sm:$0xff]
        %v1545 = vld [vmem:[%s1090] ss:$8 sm:$0x3]
        %v1547 = vperm.slane %v1545, 0
        %v1548 = vperm.slane %v1545, 1
        %1549 = vrot.lane.b32.xlu0 %v1547, 17
        %v1550 = vpop.permute.xlu0 %1549
        %1551 = vrot.lane.b32.xlu0 %v1548, 17
        %v1552 = vpop.permute.xlu0 %1551
        %v1553 = vsel %vm857, %v1550, %v1552
        %v1557 = vmul.f32 %v1542, %v1550
        %v1558 = vmul.f32 %v1543, %v1553
        %v1559 = vmul.f32 %v1544, %v1552
        %1563 = vrot.lane.b32.xlu0 %v1557, 111
        %v1564 = vpop.permute.xlu0 %1563
        %1565 = vrot.lane.b32.xlu0 %v1558, 111
        %v1566 = vpop.permute.xlu0 %1565
        %1567 = vrot.lane.b32.xlu0 %v1559, 111
        %v1568 = vpop.permute.xlu0 %1567
        %v1569 = vsel %vm840, %v1564, %v1566
        %v1570 = vsel %vm840, %v1566, %v1568
        %1573 = vst [vmem:[#allocation3 + $0x80] sm:$0xff] %v1569
        %1574 = vst [vmem:[#allocation3 + $0x88] sm:$0xff] %v1570
        %v1575 = vld [vmem:[#allocation3] sm:$0xff]
        %v1576 = vld [vmem:[#allocation3 + $0x8] sm:$0xff]
        %v1577 = vld [vmem:[#allocation3 + $0x10] sm:$0xff]
        %v1578 = vld [vmem:[#allocation3 + $0x18] sm:$0xff]
        %v1579 = vld [vmem:[#allocation3 + $0x20] sm:$0xff]
        %v1580 = vld [vmem:[#allocation3 + $0x28] sm:$0xff]
        %v1581 = vld [vmem:[#allocation3 + $0x30] sm:$0xff]
        %v1582 = vld [vmem:[#allocation3 + $0x38] sm:$0xff]
        %v1583 = vld [vmem:[#allocation3 + $0x40] sm:$0xff]
        %v1584 = vld [vmem:[#allocation3 + $0x48] sm:$0xff]
        %v1585 = vld [vmem:[#allocation3 + $0x50] sm:$0xff]
        %v1586 = vld [vmem:[#allocation3 + $0x58] sm:$0xff]
        %v1587 = vld [vmem:[#allocation3 + $0x60] sm:$0xff]
        %v1588 = vld [vmem:[#allocation3 + $0x68] sm:$0xff]
        %v1589 = vld [vmem:[#allocation3 + $0x70] sm:$0xff]
        %v1590 = vld [vmem:[#allocation3 + $0x78] sm:$0xff]
        %v1591 = vld [vmem:[#allocation3 + $0x80] sm:$0xff]
        %v1592 = vld [vmem:[#allocation3 + $0x88] sm:$0xff]
        %1594 = vset.pattern.permute.xlu0 0
        %1595 = vperm.xlu0 %1594, %v1244
        %v1596 = vpop.permute.xlu0 %1595
        %v1599 = vsel %vm1144, %v1243, 0
        %1601 = vmatpush.msra.mxu0 0.0
        %1602 = vmatpush.msra.mxu0 0.0
        %1603 = vmatpush.msra.mxu0 0.0
        %1604 = vmatpush.msra.mxu0 0.0
        %1605 = vmatpush.msra.mxu0 0.0
        %1606 = vmatpush.msra.mxu0 0.0
        %1607 = vmatpush.msra.mxu0 0.0
        %1608 = vmatpush.msra.mxu0 %v1591
        %1609 = vmatpush.msra.mxu0 %v1589
        %1610 = vmatpush.msra.mxu0 %v1587
        %1611 = vmatpush.msra.mxu0 %v1585
        %1612 = vmatpush.msra.mxu0 %v1583
        %1613 = vmatpush.msra.mxu0 %v1581
        %1614 = vmatpush.msra.mxu0 %v1579
        %1615 = vmatpush.msra.mxu0 %v1577
        %1616 = vmatpush.msra.mxu0 %v1575
        %1617 = vmatmul.f32.gmra.mxu0 %v1599
        %v1618 = vpop.f32.mrf.mxu0
        %v1619 = vadd.f32 %v1596, %v1618
        %1620 = vdwg.mxu0
        %1621 = vmatpush.msra.mxu0 0.0
        %1622 = vmatpush.msra.mxu0 0.0
        %1623 = vmatpush.msra.mxu0 0.0
        %1624 = vmatpush.msra.mxu0 0.0
        %1625 = vmatpush.msra.mxu0 0.0
        %1626 = vmatpush.msra.mxu0 0.0
        %1627 = vmatpush.msra.mxu0 0.0
        %1628 = vmatpush.msra.mxu0 %v1592
        %1629 = vmatpush.msra.mxu0 %v1590
        %1630 = vmatpush.msra.mxu0 %v1588
        %1631 = vmatpush.msra.mxu0 %v1586
        %1632 = vmatpush.msra.mxu0 %v1584
        %1633 = vmatpush.msra.mxu0 %v1582
        %1634 = vmatpush.msra.mxu0 %v1580
        %1635 = vmatpush.msra.mxu0 %v1578
        %1636 = vmatpush.msra.mxu0 %v1576
        %1637 = vmatmul.f32.gmra.mxu0 %v1599
        %v1638 = vpop.f32.mrf.mxu0
        %v1639 = vadd.f32 %v1596, %v1638
        %1640 = vdwg.mxu0
        %v1641 = vmax.f32 %v1619, 0.0
        %v1642 = vmax.f32 %v1639, 0.0
        %1644 = vset.pattern.permute.xlu0 0
        %1645 = vperm.xlu0 %1644, %v1246
        %v1646 = vpop.permute.xlu0 %1645
        %v1649 = vsel %vm1195, %v1245, 0
        %1651 = vmatpush.msra.mxu0 0.0
        %1652 = vmatpush.msra.mxu0 0.0
        %1653 = vmatpush.msra.mxu0 0.0
        %1654 = vmatpush.msra.mxu0 0.0
        %1655 = vmatpush.msra.mxu0 0.0
        %1656 = vmatpush.msra.mxu0 0.0
        %1657 = vmatpush.msra.mxu0 0.0
        %1658 = vmatpush.msra.mxu0 0.0
        %1659 = vmatpush.msra.mxu0 0.0
        %1660 = vmatpush.msra.mxu0 0.0
        %1661 = vmatpush.msra.mxu0 0.0
        %1662 = vmatpush.msra.mxu0 0.0
        %1663 = vmatpush.msra.mxu0 0.0
        %1664 = vmatpush.msra.mxu0 0.0
        %1665 = vmatpush.msra.mxu0 0.0
        %1666 = vmatpush.msra.mxu0 %v1641
        %1667 = vmatmul.f32.gmra.mxu0 %v1649
        %v1668 = vpop.f32.mrf.mxu0
        %v1669 = vadd.f32 %v1646, %v1668
        %1670 = vdwg.mxu0
        %1671 = vmatpush.msra.mxu0 0.0
        %1672 = vmatpush.msra.mxu0 0.0
        %1673 = vmatpush.msra.mxu0 0.0
        %1674 = vmatpush.msra.mxu0 0.0
        %1675 = vmatpush.msra.mxu0 0.0
        %1676 = vmatpush.msra.mxu0 0.0
        %1677 = vmatpush.msra.mxu0 0.0
        %1678 = vmatpush.msra.mxu0 0.0
        %1679 = vmatpush.msra.mxu0 0.0
        %1680 = vmatpush.msra.mxu0 0.0
        %1681 = vmatpush.msra.mxu0 0.0
        %1682 = vmatpush.msra.mxu0 0.0
        %1683 = vmatpush.msra.mxu0 0.0
        %1684 = vmatpush.msra.mxu0 0.0
        %1685 = vmatpush.msra.mxu0 0.0
        %1686 = vmatpush.msra.mxu0 %v1642
        %1687 = vmatmul.f32.gmra.mxu0 %v1649
        %v1688 = vpop.f32.mrf.mxu0
        %v1689 = vadd.f32 %v1646, %v1688
        %1690 = vdwg.mxu0
        %v1691 = vadd.f32 %v1239, %v1669
        %v1692 = vadd.f32 %v1240, %v1689
        %v1693 = vld [vmem:[%s16] sm:$0xff]
        %v1694 = vld [vmem:[%s17] sm:$0xff]
        %v1695 = vld [vmem:[%s18] sm:$0xff]
        %v1696 = vld [vmem:[%s19] sm:$0xff]
        %v1697 = vld [vmem:[%s20] sm:$0xff]
        %v1698 = vld [vmem:[%s21] sm:$0xff]
        %1700 = vset.pattern.permute.xlu0 0
        %1701 = vperm.xlu0 %1700, %v1694
        %v1702 = vpop.permute.xlu0 %1701
        %v1705 = vsel %vm1195, %v1693, 0
        %1707 = vmatpush.msra.mxu0 0.0
        %1708 = vmatpush.msra.mxu0 0.0
        %1709 = vmatpush.msra.mxu0 0.0
        %1710 = vmatpush.msra.mxu0 0.0
        %1711 = vmatpush.msra.mxu0 0.0
        %1712 = vmatpush.msra.mxu0 0.0
        %1713 = vmatpush.msra.mxu0 0.0
        %1714 = vmatpush.msra.mxu0 0.0
        %1715 = vmatpush.msra.mxu0 0.0
        %1716 = vmatpush.msra.mxu0 0.0
        %1717 = vmatpush.msra.mxu0 0.0
        %1718 = vmatpush.msra.mxu0 0.0
        %1719 = vmatpush.msra.mxu0 0.0
        %1720 = vmatpush.msra.mxu0 0.0
        %1721 = vmatpush.msra.mxu0 0.0
        %1722 = vmatpush.msra.mxu0 %v1691
        %1723 = vmatmul.f32.gmra.mxu0 %v1705
        %v1724 = vpop.f32.mrf.mxu0
        %v1725 = vadd.f32 %v1702, %v1724
        %1726 = vdwg.mxu0
        %1727 = vmatpush.msra.mxu0 0.0
        %1728 = vmatpush.msra.mxu0 0.0
        %1729 = vmatpush.msra.mxu0 0.0
        %1730 = vmatpush.msra.mxu0 0.0
        %1731 = vmatpush.msra.mxu0 0.0
        %1732 = vmatpush.msra.mxu0 0.0
        %1733 = vmatpush.msra.mxu0 0.0
        %1734 = vmatpush.msra.mxu0 0.0
        %1735 = vmatpush.msra.mxu0 0.0
        %1736 = vmatpush.msra.mxu0 0.0
        %1737 = vmatpush.msra.mxu0 0.0
        %1738 = vmatpush.msra.mxu0 0.0
        %1739 = vmatpush.msra.mxu0 0.0
        %1740 = vmatpush.msra.mxu0 0.0
        %1741 = vmatpush.msra.mxu0 0.0
        %1742 = vmatpush.msra.mxu0 %v1692
        %1743 = vmatmul.f32.gmra.mxu0 %v1705
        %v1744 = vpop.f32.mrf.mxu0
        %v1745 = vadd.f32 %v1702, %v1744
        %1746 = vdwg.mxu0
        %v1747 = vmax.f32 %v1725, 0.0
        %v1748 = vmax.f32 %v1745, 0.0
        %1749 = vst [vmem:[#allocation2 + $0x8] sm:$0xff] %v1747
        %1750 = vst [vmem:[#allocation2 + $0x10] sm:$0xff] %v1748
        %v1751 = vld [vmem:[#allocation2] sm:$0xff]
        %v1752 = vld [vmem:[#allocation2 + $0x8] sm:$0xff]
        %v1753 = vld [vmem:[#allocation2 + $0x10] sm:$0xff]
        %v1754 = vld [vmem:[#allocation4] ss:$8 sm:$0x3]
        %v1756 = vperm.slane %v1754, 0
        %v1757 = vperm.slane %v1754, 1
        %1758 = vrot.lane.b32.xlu0 %v1756, 111
        %v1759 = vpop.permute.xlu0 %1758
        %1760 = vrot.lane.b32.xlu0 %v1757, 111
        %v1761 = vpop.permute.xlu0 %1760
        %v1762 = vsel %vm840, %v1759, %v1761
        %v1766 = vmul.f32 %v1751, %v1759
        %v1767 = vmul.f32 %v1752, %v1762
        %v1768 = vmul.f32 %v1753, %v1761
        %1772 = vrot.lane.b32.xlu0 %v1766, 17
        %v1773 = vpop.permute.xlu0 %1772
        %1774 = vrot.lane.b32.xlu0 %v1767, 17
        %v1775 = vpop.permute.xlu0 %1774
        %1776 = vrot.lane.b32.xlu0 %v1768, 17
        %v1777 = vpop.permute.xlu0 %1776
        %v1778 = vsel %vm857, %v1773, %v1775
        %v1779 = vsel %vm857, %v1775, %v1777
        %1782 = vst [vmem:[#allocation3] sm:$0xff] %v1778
        %1783 = vst [vmem:[#allocation3 + $0x8] sm:$0xff] %v1779
        %v1784 = vld [vmem:[#allocation2] sm:$0xff]
        %v1785 = vld [vmem:[#allocation2 + $0x8] sm:$0xff]
        %v1786 = vld [vmem:[#allocation2 + $0x10] sm:$0xff]
        %v1787 = vld [vmem:[%s867] ss:$8 sm:$0x3]
        %v1789 = vperm.slane %v1787, 0
        %v1790 = vperm.slane %v1787, 1
        %1791 = vrot.lane.b32.xlu0 %v1789, 112
        %v1792 = vpop.permute.xlu0 %1791
        %1793 = vrot.lane.b32.xlu0 %v1790, 112
        %v1794 = vpop.permute.xlu0 %1793
        %v1795 = vsel %vm876, %v1792, %v1794
        %v1799 = vmul.f32 %v1784, %v1792
        %v1800 = vmul.f32 %v1785, %v1795
        %v1801 = vmul.f32 %v1786, %v1794
        %1805 = vrot.lane.b32.xlu0 %v1799, 16
        %v1806 = vpop.permute.xlu0 %1805
        %1807 = vrot.lane.b32.xlu0 %v1800, 16
        %v1808 = vpop.permute.xlu0 %1807
        %1809 = vrot.lane.b32.xlu0 %v1801, 16
        %v1810 = vpop.permute.xlu0 %1809
        %v1811 = vsel %vm893, %v1806, %v1808
        %v1812 = vsel %vm893, %v1808, %v1810
        %1815 = vst [vmem:[#allocation3 + $0x10] sm:$0xff] %v1811
        %1816 = vst [vmem:[#allocation3 + $0x18] sm:$0xff] %v1812
        %v1817 = vld [vmem:[#allocation2] sm:$0xff]
        %v1818 = vld [vmem:[#allocation2 + $0x8] sm:$0xff]
        %v1819 = vld [vmem:[#allocation2 + $0x10] sm:$0xff]
        %v1820 = vld [vmem:[%s903] ss:$8 sm:$0x3]
        %v1822 = vperm.slane %v1820, 0
        %v1823 = vperm.slane %v1820, 1
        %1824 = vrot.lane.b32.xlu0 %v1822, 113
        %v1825 = vpop.permute.xlu0 %1824
        %1826 = vrot.lane.b32.xlu0 %v1823, 113
        %v1827 = vpop.permute.xlu0 %1826
        %v1828 = vsel %vm912, %v1825, %v1827
        %v1832 = vmul.f32 %v1817, %v1825
        %v1833 = vmul.f32 %v1818, %v1828
        %v1834 = vmul.f32 %v1819, %v1827
        %1838 = vrot.lane.b32.xlu0 %v1832, 15
        %v1839 = vpop.permute.xlu0 %1838
        %1840 = vrot.lane.b32.xlu0 %v1833, 15
        %v1841 = vpop.permute.xlu0 %1840
        %1842 = vrot.lane.b32.xlu0 %v1834, 15
        %v1843 = vpop.permute.xlu0 %1842
        %v1844 = vsel %vm929, %v1839, %v1841
        %v1845 = vsel %vm929, %v1841, %v1843
        %1848 = vst [vmem:[#allocation3 + $0x20] sm:$0xff] %v1844
        %1849 = vst [vmem:[#allocation3 + $0x28] sm:$0xff] %v1845
        %v1850 = vld [vmem:[#allocation2] sm:$0xff]
        %v1851 = vld [vmem:[#allocation2 + $0x8] sm:$0xff]
        %v1852 = vld [vmem:[#allocation2 + $0x10] sm:$0xff]
        %v1853 = vld [vmem:[%s939] ss:$8 sm:$0x3]
        %v1855 = vperm.slane %v1853, 0
        %v1856 = vperm.slane %v1853, 1
        %1857 = vrot.lane.b32.xlu0 %v1855, 127
        %v1858 = vpop.permute.xlu0 %1857
        %1859 = vrot.lane.b32.xlu0 %v1856, 127
        %v1860 = vpop.permute.xlu0 %1859
        %v1861 = vsel %vm948, %v1858, %v1860
        %v1865 = vmul.f32 %v1850, %v1858
        %v1866 = vmul.f32 %v1851, %v1861
        %v1867 = vmul.f32 %v1852, %v1860
        %1871 = vrot.lane.b32.xlu0 %v1865, 1
        %v1872 = vpop.permute.xlu0 %1871
        %1873 = vrot.lane.b32.xlu0 %v1866, 1
        %v1874 = vpop.permute.xlu0 %1873
        %1875 = vrot.lane.b32.xlu0 %v1867, 1
        %v1876 = vpop.permute.xlu0 %1875
        %v1877 = vsel %vm965, %v1872, %v1874
        %v1878 = vsel %vm965, %v1874, %v1876
        %1881 = vst [vmem:[#allocation3 + $0x30] sm:$0xff] %v1877
        %1882 = vst [vmem:[#allocation3 + $0x38] sm:$0xff] %v1878
        %v1883 = vld [vmem:[#allocation2 + $0x8] sm:$0xff]
        %v1884 = vld [vmem:[#allocation2 + $0x10] sm:$0xff]
        %v1885 = vld [vmem:[%s974] ss:$8 sm:$0x3]
        %v1887 = vperm.slane %v1885, 0
        %v1888 = vperm.slane %v1885, 1
        %v1891 = vmul.f32 %v1883, %v1887
        %v1892 = vmul.f32 %v1884, %v1888
        %1893 = vst [vmem:[#allocation3 + $0x40] sm:$0xff] %v1891
        %1894 = vst [vmem:[#allocation3 + $0x48] sm:$0xff] %v1892
        %v1895 = vld [vmem:[#allocation2 + $0x8] sm:$0xff]
        %v1896 = vld [vmem:[#allocation2 + $0x10] sm:$0xff]
        %v1897 = vld [vmem:[#allocation2 + $0x18] sm:$0xff]
        %v1898 = vld [vmem:[%s988] ss:$8 sm:$0x3]
        %v1900 = vperm.slane %v1898, 0
        %v1901 = vperm.slane %v1898, 1
        %1902 = vrot.lane.b32.xlu0 %v1900, 1
        %v1903 = vpop.permute.xlu0 %1902
        %1904 = vrot.lane.b32.xlu0 %v1901, 1
        %v1905 = vpop.permute.xlu0 %1904
        %v1906 = vsel %vm965, %v1903, %v1905
        %v1910 = vmul.f32 %v1895, %v1903
        %v1911 = vmul.f32 %v1896, %v1906
        %v1912 = vmul.f32 %v1897, %v1905
        %1916 = vrot.lane.b32.xlu0 %v1910, 127
        %v1917 = vpop.permute.xlu0 %1916
        %1918 = vrot.lane.b32.xlu0 %v1911, 127
        %v1919 = vpop.permute.xlu0 %1918
        %1920 = vrot.lane.b32.xlu0 %v1912, 127
        %v1921 = vpop.permute.xlu0 %1920
        %v1922 = vsel %vm948, %v1917, %v1919
        %v1923 = vsel %vm948, %v1919, %v1921
        %1926 = vst [vmem:[#allocation3 + $0x50] sm:$0xff] %v1922
        %1927 = vst [vmem:[#allocation3 + $0x58] sm:$0xff] %v1923
        %v1928 = vld [vmem:[#allocation2 + $0x8] sm:$0xff]
        %v1929 = vld [vmem:[#allocation2 + $0x10] sm:$0xff]
        %v1930 = vld [vmem:[#allocation2 + $0x18] sm:$0xff]
        %v1931 = vld [vmem:[%s1022] ss:$8 sm:$0x3]
        %v1933 = vperm.slane %v1931, 0
        %v1934 = vperm.slane %v1931, 1
        %1935 = vrot.lane.b32.xlu0 %v1933, 15
        %v1936 = vpop.permute.xlu0 %1935
        %1937 = vrot.lane.b32.xlu0 %v1934, 15
        %v1938 = vpop.permute.xlu0 %1937
        %v1939 = vsel %vm929, %v1936, %v1938
        %v1943 = vmul.f32 %v1928, %v1936
        %v1944 = vmul.f32 %v1929, %v1939
        %v1945 = vmul.f32 %v1930, %v1938
        %1949 = vrot.lane.b32.xlu0 %v1943, 113
        %v1950 = vpop.permute.xlu0 %1949
        %1951 = vrot.lane.b32.xlu0 %v1944, 113
        %v1952 = vpop.permute.xlu0 %1951
        %1953 = vrot.lane.b32.xlu0 %v1945, 113
        %v1954 = vpop.permute.xlu0 %1953
        %v1955 = vsel %vm912, %v1950, %v1952
        %v1956 = vsel %vm912, %v1952, %v1954
        %1959 = vst [vmem:[#allocation3 + $0x60] sm:$0xff] %v1955
        %1960 = vst [vmem:[#allocation3 + $0x68] sm:$0xff] %v1956
        %v1961 = vld [vmem:[#allocation2 + $0x8] sm:$0xff]
        %v1962 = vld [vmem:[#allocation2 + $0x10] sm:$0xff]
        %v1963 = vld [vmem:[#allocation2 + $0x18] sm:$0xff]
        %v1964 = vld [vmem:[%s1056] ss:$8 sm:$0x3]
        %v1966 = vperm.slane %v1964, 0
        %v1967 = vperm.slane %v1964, 1
        %1968 = vrot.lane.b32.xlu0 %v1966, 16
        %v1969 = vpop.permute.xlu0 %1968
        %1970 = vrot.lane.b32.xlu0 %v1967, 16
        %v1971 = vpop.permute.xlu0 %1970
        %v1972 = vsel %vm893, %v1969, %v1971
        %v1976 = vmul.f32 %v1961, %v1969
        %v1977 = vmul.f32 %v1962, %v1972
        %v1978 = vmul.f32 %v1963, %v1971
        %1982 = vrot.lane.b32.xlu0 %v1976, 112
        %v1983 = vpop.permute.xlu0 %1982
        %1984 = vrot.lane.b32.xlu0 %v1977, 112
        %v1985 = vpop.permute.xlu0 %1984
        %1986 = vrot.lane.b32.xlu0 %v1978, 112
        %v1987 = vpop.permute.xlu0 %1986
        %v1988 = vsel %vm876, %v1983, %v1985
        %v1989 = vsel %vm876, %v1985, %v1987
        %1992 = vst [vmem:[#allocation3 + $0x70] sm:$0xff] %v1988
        %1993 = vst [vmem:[#allocation3 + $0x78] sm:$0xff] %v1989
        %v1994 = vld [vmem:[#allocation2 + $0x8] sm:$0xff]
        %v1995 = vld [vmem:[#allocation2 + $0x10] sm:$0xff]
        %v1996 = vld [vmem:[#allocation2 + $0x18] sm:$0xff]
        %v1997 = vld [vmem:[%s1090] ss:$8 sm:$0x3]
        %v1999 = vperm.slane %v1997, 0
        %v2000 = vperm.slane %v1997, 1
        %2001 = vrot.lane.b32.xlu0 %v1999, 17
        %v2002 = vpop.permute.xlu0 %2001
        %2003 = vrot.lane.b32.xlu0 %v2000, 17
        %v2004 = vpop.permute.xlu0 %2003
        %v2005 = vsel %vm857, %v2002, %v2004
        %v2009 = vmul.f32 %v1994, %v2002
        %v2010 = vmul.f32 %v1995, %v2005
        %v2011 = vmul.f32 %v1996, %v2004
        %2015 = vrot.lane.b32.xlu0 %v2009, 111
        %v2016 = vpop.permute.xlu0 %2015
        %2017 = vrot.lane.b32.xlu0 %v2010, 111
        %v2018 = vpop.permute.xlu0 %2017
        %2019 = vrot.lane.b32.xlu0 %v2011, 111
        %v2020 = vpop.permute.xlu0 %2019
        %v2021 = vsel %vm840, %v2016, %v2018
        %v2022 = vsel %vm840, %v2018, %v2020
        %2025 = vst [vmem:[#allocation3 + $0x80] sm:$0xff] %v2021
        %2026 = vst [vmem:[#allocation3 + $0x88] sm:$0xff] %v2022
        %v2027 = vld [vmem:[#allocation3] sm:$0xff]
        %v2028 = vld [vmem:[#allocation3 + $0x8] sm:$0xff]
        %v2029 = vld [vmem:[#allocation3 + $0x10] sm:$0xff]
        %v2030 = vld [vmem:[#allocation3 + $0x18] sm:$0xff]
        %v2031 = vld [vmem:[#allocation3 + $0x20] sm:$0xff]
        %v2032 = vld [vmem:[#allocation3 + $0x28] sm:$0xff]
        %v2033 = vld [vmem:[#allocation3 + $0x30] sm:$0xff]
        %v2034 = vld [vmem:[#allocation3 + $0x38] sm:$0xff]
        %v2035 = vld [vmem:[#allocation3 + $0x40] sm:$0xff]
        %v2036 = vld [vmem:[#allocation3 + $0x48] sm:$0xff]
        %v2037 = vld [vmem:[#allocation3 + $0x50] sm:$0xff]
        %v2038 = vld [vmem:[#allocation3 + $0x58] sm:$0xff]
        %v2039 = vld [vmem:[#allocation3 + $0x60] sm:$0xff]
        %v2040 = vld [vmem:[#allocation3 + $0x68] sm:$0xff]
        %v2041 = vld [vmem:[#allocation3 + $0x70] sm:$0xff]
        %v2042 = vld [vmem:[#allocation3 + $0x78] sm:$0xff]
        %v2043 = vld [vmem:[#allocation3 + $0x80] sm:$0xff]
        %v2044 = vld [vmem:[#allocation3 + $0x88] sm:$0xff]
        %2046 = vset.pattern.permute.xlu0 0
        %2047 = vperm.xlu0 %2046, %v1696
        %v2048 = vpop.permute.xlu0 %2047
        %v2051 = vsel %vm1144, %v1695, 0
        %2053 = vmatpush.msra.mxu0 0.0
        %2054 = vmatpush.msra.mxu0 0.0
        %2055 = vmatpush.msra.mxu0 0.0
        %2056 = vmatpush.msra.mxu0 0.0
        %2057 = vmatpush.msra.mxu0 0.0
        %2058 = vmatpush.msra.mxu0 0.0
        %2059 = vmatpush.msra.mxu0 0.0
        %2060 = vmatpush.msra.mxu0 %v2043
        %2061 = vmatpush.msra.mxu0 %v2041
        %2062 = vmatpush.msra.mxu0 %v2039
        %2063 = vmatpush.msra.mxu0 %v2037
        %2064 = vmatpush.msra.mxu0 %v2035
        %2065 = vmatpush.msra.mxu0 %v2033
        %2066 = vmatpush.msra.mxu0 %v2031
        %2067 = vmatpush.msra.mxu0 %v2029
        %2068 = vmatpush.msra.mxu0 %v2027
        %2069 = vmatmul.f32.gmra.mxu0 %v2051
        %v2070 = vpop.f32.mrf.mxu0
        %v2071 = vadd.f32 %v2048, %v2070
        %2072 = vdwg.mxu0
        %2073 = vmatpush.msra.mxu0 0.0
        %2074 = vmatpush.msra.mxu0 0.0
        %2075 = vmatpush.msra.mxu0 0.0
        %2076 = vmatpush.msra.mxu0 0.0
        %2077 = vmatpush.msra.mxu0 0.0
        %2078 = vmatpush.msra.mxu0 0.0
        %2079 = vmatpush.msra.mxu0 0.0
        %2080 = vmatpush.msra.mxu0 %v2044
        %2081 = vmatpush.msra.mxu0 %v2042
        %2082 = vmatpush.msra.mxu0 %v2040
        %2083 = vmatpush.msra.mxu0 %v2038
        %2084 = vmatpush.msra.mxu0 %v2036
        %2085 = vmatpush.msra.mxu0 %v2034
        %2086 = vmatpush.msra.mxu0 %v2032
        %2087 = vmatpush.msra.mxu0 %v2030
        %2088 = vmatpush.msra.mxu0 %v2028
        %2089 = vmatmul.f32.gmra.mxu0 %v2051
        %v2090 = vpop.f32.mrf.mxu0
        %v2091 = vadd.f32 %v2048, %v2090
        %2092 = vdwg.mxu0
        %v2093 = vmax.f32 %v2071, 0.0
        %v2094 = vmax.f32 %v2091, 0.0
        %2096 = vset.pattern.permute.xlu0 0
        %2097 = vperm.xlu0 %2096, %v1698
        %v2098 = vpop.permute.xlu0 %2097
        %v2101 = vsel %vm1195, %v1697, 0
        %2103 = vmatpush.msra.mxu0 0.0
        %2104 = vmatpush.msra.mxu0 0.0
        %2105 = vmatpush.msra.mxu0 0.0
        %2106 = vmatpush.msra.mxu0 0.0
        %2107 = vmatpush.msra.mxu0 0.0
        %2108 = vmatpush.msra.mxu0 0.0
        %2109 = vmatpush.msra.mxu0 0.0
        %2110 = vmatpush.msra.mxu0 0.0
        %2111 = vmatpush.msra.mxu0 0.0
        %2112 = vmatpush.msra.mxu0 0.0
        %2113 = vmatpush.msra.mxu0 0.0
        %2114 = vmatpush.msra.mxu0 0.0
        %2115 = vmatpush.msra.mxu0 0.0
        %2116 = vmatpush.msra.mxu0 0.0
        %2117 = vmatpush.msra.mxu0 0.0
        %2118 = vmatpush.msra.mxu0 %v2093
        %2119 = vmatmul.f32.gmra.mxu0 %v2101
        %v2120 = vpop.f32.mrf.mxu0
        %v2121 = vadd.f32 %v2098, %v2120
        %2122 = vdwg.mxu0
        %2123 = vmatpush.msra.mxu0 0.0
        %2124 = vmatpush.msra.mxu0 0.0
        %2125 = vmatpush.msra.mxu0 0.0
        %2126 = vmatpush.msra.mxu0 0.0
        %2127 = vmatpush.msra.mxu0 0.0
        %2128 = vmatpush.msra.mxu0 0.0
        %2129 = vmatpush.msra.mxu0 0.0
        %2130 = vmatpush.msra.mxu0 0.0
        %2131 = vmatpush.msra.mxu0 0.0
        %2132 = vmatpush.msra.mxu0 0.0
        %2133 = vmatpush.msra.mxu0 0.0
        %2134 = vmatpush.msra.mxu0 0.0
        %2135 = vmatpush.msra.mxu0 0.0
        %2136 = vmatpush.msra.mxu0 0.0
        %2137 = vmatpush.msra.mxu0 0.0
        %2138 = vmatpush.msra.mxu0 %v2094
        %2139 = vmatmul.f32.gmra.mxu0 %v2101
        %v2140 = vpop.f32.mrf.mxu0
        %v2141 = vadd.f32 %v2098, %v2140
        %2142 = vdwg.mxu0
        %v2143 = vadd.f32 %v1691, %v2121
        %v2144 = vadd.f32 %v1692, %v2141
        %2145 = vst [vmem:[%s693] sm:$0xff] %v2143
        %2146 = vst [vmem:[%s693 + $0x8] sm:$0xff] %v2144
        %s2147 = sand.u32 %s512, 1
        %s2148 = scalar_lea.sflag [#allocation6], %s2147
        %s2149 = sand.u32 %s512, 1
        %s2150 = smul.addr %s2149, 16
        %s2151 = scalar_lea.vmem [#allocation7], %s2150
        // Predicated region
        $region113: #{tpu_custom_call.1} parent=107 // pred_check
          %p2152 = pneg %p522
        $region114: #{tpu_custom_call.1} parent=107 // pred_check_branch
          %2154 = sbr.rel (%p2152) target = $region116
        $region115: #{tpu_custom_call.1} parent=107 // pred_region
          %2156 = vsyncadd %s2148, 0
          %s2157 = smul.addr %s37, 2
          %s2158 = smul.addr %s2157, 8
          %s2159 = scalar_lea.hbm %s22, %s2158
          %s2161 = sshll.u32 %s2151, 4
          %s2162 = int_to_ptr.vmem [resolvable:$true] %s2161
          %s2163 = sshll.u32 %s2159, 4
          %s2164 = int_to_ptr.hbm [resolvable:$true] %s2163
          %2166 = dma.vmem_to_hbm [thread:$0]  %s2162, 256, %s2164, %s2148
        $region116: #{tpu_custom_call.1} parent=107 // pred_fallthru
          _
      $region108: #{tpu_custom_call.1} parent=5 // pred_fallthru
        _
      %p2167 = scmp.le.s32.totalorder 2, %s32
      // Predicated region
      $region117: #{tpu_custom_call.1} parent=5 // pred_check
        %p2168 = pneg %p2167
      $region118: #{tpu_custom_call.1} parent=5 // pred_check_branch
        %2170 = sbr.rel (%p2168) target = $region120
      $region119: #{tpu_custom_call.1} parent=5 // pred_region
        %s2171 = ssub.s32 %s32, 2
        // Predicated region
        $region121: #{tpu_custom_call.1} parent=119 // pred_check
          %p2172 = pneg %p528
        $region122: #{tpu_custom_call.1} parent=119 // pred_check_branch
          %2174 = sbr.rel (%p2172) target = $region124
        $region123: #{tpu_custom_call.1} parent=119 // pred_region
          %s2175 = sand.u32 %s513, 1
          %s2176 = scalar_lea.sflag [#allocation6], %s2175
          %s2177 = sand.u32 %s513, 1
          %s2178 = smul.addr %s2177, 16
          %s2179 = scalar_lea.vmem [#allocation7], %s2178
          %2181 = dma.done %s2176, 256
        $region124: #{tpu_custom_call.1} parent=119 // pred_fallthru
          _
      $region120: #{tpu_custom_call.1} parent=5 // pred_fallthru
        _
    $region6: #{tpu_custom_call.1} parent=1 // loop_footer
      %s36 = sadd.s32 1, %s32
    $region7: #{tpu_custom_call.1} parent=1 // loop_footer_branch
      %31 = sbr.rel target = $region3
    $region8: #{tpu_custom_call.1} parent=1 // loop_exit
      _
    %2182 = vsyncpa [#allocation5], 1
    %s2183 = scalar_lea.sflag [#allocation5], 1
    %2184 = vsyncpa %s2183, 1
    %2185 = vsyncpa [#allocation6], 1
    %s2186 = scalar_lea.sflag [#allocation6], 1
    %2187 = vsyncpa %s2186, 1

</llo_original>
